<compile_context>
chip_gen: v6e
topology: v6e:2x2x1
jax: 0.10.0
libtpu: 0.0.40
codegen_flags: <defaults>
</compile_context>

<pallas_src>
import functools
import math

import jax
import jax.numpy as jnp
from jax.experimental import pallas as pl
from jax.experimental.pallas import tpu as pltpu

LANES = 128
FOLD = 256            # sublane extent of the resident accumulator block
MAX_ROW_TILE = 4096   # (4096,128) f32 block = 2 MiB per stream


def _round_up(a, m):
    return ((a + m - 1) // m) * m


def _softplus_neg(x):
    # stable softplus(-x) = max(-x, 0) + log1p(exp(-|x|))
    return jnp.maximum(-x, 0.0) + jnp.log1p(jnp.exp(-jnp.abs(x)))


def _bce_elementwise(x, t, pw, w):
    sp = _softplus_neg(x)
    if pw is None:
        loss = (1.0 - t) * x + sp
    else:
        loss = (1.0 - t) * x + (1.0 + (pw - 1.0) * t) * sp
    if w is not None:
        loss = loss * w
    return loss


def _bce_kernel(*refs, pw_kind, w_kind, rows, row_tile, inner, needs_mask):
    it = iter(refs)
    x_ref = next(it)
    t_ref = next(it)
    pw_ref = next(it) if pw_kind is not None else None
    w_ref = next(it) if w_kind is not None else None
    out_ref = next(it)

    s = pl.program_id(0)
    i = pl.program_id(1)

    @pl.when(i == 0)
    def _init():
        out_ref[...] = jnp.zeros_like(out_ref)

    x = x_ref[...].astype(jnp.float32)
    t = t_ref[...].astype(jnp.float32)
    # TODO(synk): if profiling shows the single EUP slot binds, compute the two
    # transcendentals in bf16 on v6e/v7x (keep the accumulation in f32).
    sp = _softplus_neg(x)

    if pw_kind is not None:
        pw = pw_ref[0, 0] if pw_kind == "smem" else pw_ref[...].astype(jnp.float32)
        loss = (1.0 - t) * x + (1.0 + (pw - 1.0) * t) * sp
    else:
        loss = (1.0 - t) * x + sp
    if w_kind is not None:
        w = w_ref[0, 0] if w_kind == "smem" else w_ref[...].astype(jnp.float32)
        loss = loss * w

    def _accumulate(v):
        # (row_tile,128) -> (FOLD,128): split the major (sublane-group) dim and
        # add vregs.  Pure VPU adds into the resident output block; no XLU
        # reduction and no large HBM writeback.
        out_ref[...] += v.reshape(row_tile // FOLD, FOLD, LANES).sum(axis=0)

    if needs_mask:
        gidx = s * inner + i                 # un-clamped global block index
        valid = rows - gidx * row_tile       # valid rows in this block (may be <= 0)

        @pl.when(valid >= row_tile)          # full interior block: no mask cost
        def _full():
            _accumulate(loss)

        @pl.when(valid < row_tile)           # edge / duplicated overflow block
        def _partial():
            r = jax.lax.broadcasted_iota(jnp.int32, loss.shape, 0)
            _accumulate(jnp.where(r < valid, loss, 0.0))
    else:
        _accumulate(loss)


def _prep_param(param, shape, rows_bulk):
    """Classify an optional broadcastable parameter (pos_weight / weight).

    Returns (kind, arr):
      (None, None)                -> absent, no stream
      ('smem', (1,1) f32)         -> scalar; lives in SMEM, no HBM stream
      ('col',  (rows,1) f32)      -> constant within each flattened 128-lane row
      ('full', (rows,128) f32)    -> general broadcast fallback (extra stream)
    """
    if param is None:
        return None, None
    p = jnp.asarray(param, dtype=jnp.float32)
    if p.size == 1:
        return "smem", p.reshape(1, 1)

    ndim = len(shape)
    pshape = (1,) * (ndim - p.ndim) + tuple(p.shape)

    # number of trailing dims over which the param is broadcast
    k = 0
    for d in reversed(pshape):
        if d != 1:
            break
        k += 1
    tail = math.prod(shape[ndim - k:]) if k > 0 else 1

    if k > 0 and tail % LANES == 0:
        # e.g. per-channel pos_weight (1,C,1,1) with H*W % 128 == 0: every
        # flattened 128-lane row sees one value -> tiny (rows,1) column stream.
        # (tail % 128 == 0 implies numel % 128 == 0, so rows_bulk covers it all.)
        lead_shape = shape[:ndim - k]
        p_lead = jnp.broadcast_to(p.reshape(pshape[:ndim - k]), lead_shape)
        col = jnp.repeat(p_lead.reshape(-1), tail // LANES).reshape(rows_bulk, 1)
        return "col", col

    # General fallback: stream the full broadcast.
    # TODO(synk): an SMEM lookup table would avoid this third full-size stream.
    full = jnp.broadcast_to(p.reshape(pshape), shape).reshape(-1)
    full = full[: rows_bulk * LANES]
    return "full", full.reshape(rows_bulk, LANES)


def bce_with_logits_loss(logits, targets, pos_weight=None, weight=None,
                         reduction="mean", max_row_tile=MAX_ROW_TILE):
    """Pallas TPU implementation of F.binary_cross_entropy_with_logits.

    Supports reduction in {'mean', 'sum'} (module default is 'mean').
    pos_weight / weight may be None or arrays broadcastable to logits.shape.
    Returns a scalar float32 (matching PyTorch's 0-dim result).
    """
    # TODO(synk): reduction='none' (elementwise output) is not implemented.
    if reduction not in ("mean", "sum"):
        raise NotImplementedError(f"reduction={reduction!r} not supported")

    shape = tuple(logits.shape)
    numel = math.prod(shape)
    if numel // LANES >= (1 << 31):   # row indices are int32 in-kernel
        raise NotImplementedError("inputs with >= 2**38 elements not supported")

    tail = numel % LANES
    bulk = numel - tail
    rows = bulk // LANES

    x_flat = logits.reshape(-1)
    t_flat = targets.reshape(-1)

    total = jnp.float32(0.0)

    if rows > 0:
        # Lane-dense (rows, 128) views: a free reshape when numel % 128 == 0
        # (the typical NCHW case); otherwise only the tiny tail is split off.
        x2 = (x_flat if tail == 0 else x_flat[:bulk]).reshape(rows, LANES)
        t2 = (t_flat if tail == 0 else t_flat[:bulk]).reshape(rows, LANES)

        row_tile = min(_round_up(max_row_tile, FOLD), _round_up(rows, FOLD))
        total_blocks = -(-rows // row_tile)

        # v7x megacore: always expose a 2-way "parallel" axis when there are
        # >= 2 blocks.  An odd leftover grid step re-reads the last block via a
        # clamped index_map and contributes zero (masked).  Harmless
        # (sequential) on single-TC chips.
        splits = 2 if total_blocks >= 2 else 1
        inner = -(-total_blocks // splits)
        needs_mask = (rows % row_tile != 0) or (splits * inner != total_blocks)

        if splits * inner == total_blocks:
            main_idx = lambda s, i: (s * inner + i, 0)
        else:
            main_idx = lambda s, i: (jnp.minimum(s * inner + i, total_blocks - 1), 0)

        main_spec = pl.BlockSpec((row_tile, LANES), main_idx)
        col_spec = pl.BlockSpec((row_tile, 1), main_idx)
        smem_spec = pl.BlockSpec(memory_space=pltpu.MemorySpace.SMEM)

        pw_kind, pw_arr = _prep_param(pos_weight, shape, rows)
        w_kind, w_arr = _prep_param(weight, shape, rows)

        in_specs = [main_spec, main_spec]
        inputs = [x2, t2]
        for kind, arr in ((pw_kind, pw_arr), (w_kind, w_arr)):
            if kind is None:
                continue
            in_specs.append({"smem": smem_spec, "col": col_spec,
                             "full": main_spec}[kind])
            inputs.append(arr)

        kernel = functools.partial(
            _bce_kernel, pw_kind=pw_kind, w_kind=w_kind, rows=rows,
            row_tile=row_tile, inner=inner, needs_mask=needs_mask)

        partial_sums = pl.pallas_call(
            kernel,
            out_shape=jax.ShapeDtypeStruct((splits * FOLD, LANES), jnp.float32),
            grid_spec=pltpu.PrefetchScalarGridSpec(
                num_scalar_prefetch=0,
                grid=(splits, inner),
                in_specs=in_specs,
                out_specs=pl.BlockSpec((FOLD, LANES), lambda s, i: (s, 0)),
            ),
            compiler_params=pltpu.CompilerParams(
                dimension_semantics=("parallel", "arbitrary"),
                vmem_limit_bytes=32 * 1024 * 1024),
        )(*inputs)

        total = total + jnp.sum(partial_sums)

    if tail:
        # < 128 leftover elements: handled in plain XLA (negligible) instead of
        # padding and re-streaming both full-size inputs through HBM.
        xt = x_flat[bulk:].astype(jnp.float32)
        tt = t_flat[bulk:].astype(jnp.float32)
        pwt = None
        if pos_weight is not None:
            pwt = jnp.broadcast_to(jnp.asarray(pos_weight, jnp.float32),
                                   shape).reshape(-1)[bulk:]
        wt = None
        if weight is not None:
            wt = jnp.broadcast_to(jnp.asarray(weight, jnp.float32),
                                  shape).reshape(-1)[bulk:]
        total = total + jnp.sum(_bce_elementwise(xt, tt, pwt, wt))

    if reduction == "mean":
        total = total / jnp.float32(numel)
    return total


def _reference_bce(logits, targets, pos_weight=None, weight=None, reduction="mean"):
    x = logits.astype(jnp.float32)
    t = targets.astype(jnp.float32)
    pw = (None if pos_weight is None
          else jnp.broadcast_to(jnp.asarray(pos_weight, jnp.float32), x.shape))
    w = (None if weight is None
         else jnp.broadcast_to(jnp.asarray(weight, jnp.float32), x.shape))
    loss = _bce_elementwise(x, t, pw, w)
    return jnp.mean(loss) if reduction == "mean" else jnp.sum(loss)


if __name__ == "__main__":
    key = jax.random.PRNGKey(0)
    k1, k2, k3, k4 = jax.random.split(key, 4)

    # Case 1: typical module usage -- NCHW logits/targets, per-class pos_weight
    # broadcast over N, H, W (PyTorch pos_weight semantics), no elementwise weight.
    N, C, H, W = 2, 4, 16, 16
    logits = jax.random.normal(k1, (N, C, H, W), dtype=jnp.float32)
    targets = (jax.random.uniform(k2, (N, C, H, W)) > 0.5).astype(jnp.float32)
    pos_weight = (1.0 + 0.25 * jnp.arange(C, dtype=jnp.float32)).reshape(1, C, 1, 1)

    out = bce_with_logits_loss(logits, targets, pos_weight=pos_weight,
                               weight=None, reduction="mean")
    out = jax.block_until_ready(out)
    ref = _reference_bce(logits, targets, pos_weight, None, "mean")
    assert jnp.allclose(out, ref, rtol=1e-5, atol=1e-5), (out, ref)

    # Case 2 (small): exercises the guaranteed 2-way parallel split, the clamped
    # duplicate (masked) block, scalar SMEM pos_weight/weight, and 'sum'.
    x2 = jax.random.normal(k3, (3, 4, 80, 80), dtype=jnp.float32)
    t2 = (jax.random.uniform(k4, (3, 4, 80, 80)) > 0.5).astype(jnp.float32)
    out2 = bce_with_logits_loss(x2, t2, pos_weight=jnp.float32(1.7),
                                weight=jnp.float32(0.5), reduction="sum",
                                max_row_tile=256)
    out2 = jax.block_until_ready(out2)
    ref2 = _reference_bce(x2, t2, jnp.float32(1.7), jnp.float32(0.5), "sum")
    assert jnp.allclose(out2, ref2, rtol=1e-5, atol=1e-2), (out2, ref2)

    print("KERNEL_OK")
</pallas_src>

<mosaic_0001>
module attributes {stable_mosaic.version = 11 : i64} {
  func.func @_bce_kernel(%arg0: i32, %arg1: i32, %arg2: memref<256x128xf32, #tpu.memory_space<vmem>>, %arg3: memref<256x128xf32, #tpu.memory_space<vmem>>, %arg4: memref<256x1xf32, #tpu.memory_space<vmem>>, %arg5: memref<256x128xf32, #tpu.memory_space<vmem>>) attributes {dimension_semantics = [#tpu.dimension_semantics<parallel>, #tpu.dimension_semantics<arbitrary>], iteration_bounds = array<i64: 1, 1>, scalar_prefetch = 0 : i64, scratch_operands = 0 : i64, tpu.core_type = #tpu.core_type<tc>, window_params = [{transform_indices = @transform_0, window_bounds = array<i64: 256, 128>}, {transform_indices = @transform_1, window_bounds = array<i64: 256, 128>}, {transform_indices = @transform_2, window_bounds = array<i64: 256, 1>}, {transform_indices = @transform_3, window_bounds = array<i64: 256, 128>}]} {
    %c0_i32 = arith.constant 0 : i32
    %0 = arith.cmpi eq, %arg1, %c0_i32 : i32
    %1 = arith.extui %0 : i1 to i32
    %c0_i32_0 = arith.constant 0 : i32
    %2 = arith.cmpi ne, %1, %c0_i32_0 : i32
    scf.if %2 {
      %cst_15 = arith.constant 0.000000e+00 : f32
      %37 = vector.broadcast %cst_15 : f32 to vector<256x128xf32>
      %c0_16 = arith.constant 0 : index
      %c0_17 = arith.constant 0 : index
      %38 = vector.load %arg5[%c0_16, %c0_17] : memref<256x128xf32, #tpu.memory_space<vmem>>, vector<256x128xf32>
      tpu.vector_store %arg5[%c0_16, %c0_17], %37 {strides = array<i32>} : memref<256x128xf32, #tpu.memory_space<vmem>>, vector<256x128xf32>,
    } else {
    }
    %c0 = arith.constant 0 : index
    %c0_1 = arith.constant 0 : index
    %3 = vector.load %arg2[%c0, %c0_1] : memref<256x128xf32, #tpu.memory_space<vmem>>, vector<256x128xf32>
    %c0_2 = arith.constant 0 : index
    %c0_3 = arith.constant 0 : index
    %4 = vector.load %arg3[%c0_2, %c0_3] : memref<256x128xf32, #tpu.memory_space<vmem>>, vector<256x128xf32>
    %cst = arith.constant 0.000000e+00 : f32
    %5 = vector.broadcast %cst : f32 to vector<256x128xf32>
    %6 = arith.subf %5, %3 : vector<256x128xf32>
    %cst_4 = arith.constant 0.000000e+00 : f32
    %7 = vector.broadcast %cst_4 : f32 to vector<256x128xf32>
    %8 = arith.maximumf %6, %7 : vector<256x128xf32>
    %9 = math.absf %3 : vector<256x128xf32>
    %cst_5 = arith.constant 0.000000e+00 : f32
    %10 = vector.broadcast %cst_5 : f32 to vector<256x128xf32>
    %11 = arith.subf %10, %9 : vector<256x128xf32>
    %12 = math.exp %11 : vector<256x128xf32>
    %13 = math.log1p %12 : vector<256x128xf32>
    %14 = arith.addf %8, %13 : vector<256x128xf32>
    %c0_6 = arith.constant 0 : index
    %c0_7 = arith.constant 0 : index
    %15 = vector.load %arg4[%c0_6, %c0_7] : memref<256x1xf32, #tpu.memory_space<vmem>>, vector<256x1xf32>
    %cst_8 = arith.constant 1.000000e+00 : f32
    %16 = vector.broadcast %cst_8 : f32 to vector<256x128xf32>
    %17 = arith.subf %16, %4 : vector<256x128xf32>
    %18 = arith.mulf %17, %3 : vector<256x128xf32>
    %cst_9 = arith.constant 1.000000e+00 : f32
    %19 = vector.broadcast %cst_9 : f32 to vector<256x1xf32>
    %20 = arith.subf %15, %19 : vector<256x1xf32>
    %21 = vector.broadcast %20 : vector<256x1xf32> to vector<256x128xf32>
    %22 = arith.mulf %21, %4 : vector<256x128xf32>
    %cst_10 = arith.constant 1.000000e+00 : f32
    %23 = vector.broadcast %cst_10 : f32 to vector<256x128xf32>
    %24 = arith.addf %23, %22 : vector<256x128xf32>
    %25 = arith.mulf %24, %14 : vector<256x128xf32>
    %26 = arith.addf %18, %25 : vector<256x128xf32>
    %c1_i32 = arith.constant 1 : i32
    %27 = arith.muli %arg0, %c1_i32 : i32
    %28 = arith.addi %27, %arg1 : i32
    %c256_i32 = arith.constant 256 : i32
    %29 = arith.muli %28, %c256_i32 : i32
    %c16_i32 = arith.constant 16 : i32
    %30 = arith.subi %c16_i32, %29 : i32
    %c256_i32_11 = arith.constant 256 : i32
    %31 = arith.cmpi sge, %30, %c256_i32_11 : i32
    %32 = arith.extui %31 : i1 to i32
    %c0_i32_12 = arith.constant 0 : i32
    %33 = arith.cmpi ne, %32, %c0_i32_12 : i32
    scf.if %33 {
      %c0_15 = arith.constant 0 : index
      %c0_16 = arith.constant 0 : index
      %37 = vector.load %arg5[%c0_15, %c0_16] : memref<256x128xf32, #tpu.memory_space<vmem>>, vector<256x128xf32>
      %38 = vector.shape_cast %26 : vector<256x128xf32> to vector<1x256x128xf32>
      %cst_17 = arith.constant dense<0.000000e+00> : vector<256x128xf32>
      %39 = vector.multi_reduction <add>, %38, %cst_17 [0] : vector<1x256x128xf32> to vector<256x128xf32>
      %40 = arith.addf %37, %39 : vector<256x128xf32>
      %c0_18 = arith.constant 0 : index
      %c0_19 = arith.constant 0 : index
      %41 = vector.load %arg5[%c0_18, %c0_19] : memref<256x128xf32, #tpu.memory_space<vmem>>, vector<256x128xf32>
      tpu.vector_store %arg5[%c0_18, %c0_19], %40 {strides = array<i32>} : memref<256x128xf32, #tpu.memory_space<vmem>>, vector<256x128xf32>,
    } else {
    }
    %c256_i32_13 = arith.constant 256 : i32
    %34 = arith.cmpi slt, %30, %c256_i32_13 : i32
    %35 = arith.extui %34 : i1 to i32
    %c0_i32_14 = arith.constant 0 : i32
    %36 = arith.cmpi ne, %35, %c0_i32_14 : i32
    scf.if %36 {
      %37 = tpu.iota {dimensions = array<i32: 0>} : vector<256x128xi32>
      %38 = vector.broadcast %30 : i32 to vector<256x128xi32>
      %39 = arith.cmpi slt, %37, %38 : vector<256x128xi32>
      %cst_15 = arith.constant 0.000000e+00 : f32
      %40 = vector.broadcast %cst_15 : f32 to vector<256x128xf32>
      %41 = arith.select %39, %26, %40 : vector<256x128xi1>, vector<256x128xf32>
      %c0_16 = arith.constant 0 : index
      %c0_17 = arith.constant 0 : index
      %42 = vector.load %arg5[%c0_16, %c0_17] : memref<256x128xf32, #tpu.memory_space<vmem>>, vector<256x128xf32>
      %43 = vector.shape_cast %41 : vector<256x128xf32> to vector<1x256x128xf32>
      %cst_18 = arith.constant dense<0.000000e+00> : vector<256x128xf32>
      %44 = vector.multi_reduction <add>, %43, %cst_18 [0] : vector<1x256x128xf32> to vector<256x128xf32>
      %45 = arith.addf %42, %44 : vector<256x128xf32>
      %c0_19 = arith.constant 0 : index
      %c0_20 = arith.constant 0 : index
      %46 = vector.load %arg5[%c0_19, %c0_20] : memref<256x128xf32, #tpu.memory_space<vmem>>, vector<256x128xf32>
      tpu.vector_store %arg5[%c0_19, %c0_20], %45 {strides = array<i32>} : memref<256x128xf32, #tpu.memory_space<vmem>>, vector<256x128xf32>,
    } else {
    }
    return
  }
  func.func @transform_0(%arg0: i32, %arg1: i32) -> (i32, i32) {
    %c1_i32 = arith.constant 1 : i32
    %0 = arith.muli %arg0, %c1_i32 : i32
    %1 = arith.addi %0, %arg1 : i32
    %c0_i32 = arith.constant 0 : i32
    %c0_i32_0 = arith.constant 0 : i32
    return %1, %c0_i32 : i32, i32
  }
  func.func @transform_1(%arg0: i32, %arg1: i32) -> (i32, i32) {
    %c1_i32 = arith.constant 1 : i32
    %0 = arith.muli %arg0, %c1_i32 : i32
    %1 = arith.addi %0, %arg1 : i32
    %c0_i32 = arith.constant 0 : i32
    %c0_i32_0 = arith.constant 0 : i32
    return %1, %c0_i32 : i32, i32
  }
  func.func @transform_2(%arg0: i32, %arg1: i32) -> (i32, i32) {
    %c1_i32 = arith.constant 1 : i32
    %0 = arith.muli %arg0, %c1_i32 : i32
    %1 = arith.addi %0, %arg1 : i32
    %c0_i32 = arith.constant 0 : i32
    %c0_i32_0 = arith.constant 0 : i32
    return %1, %c0_i32 : i32, i32
  }
  func.func @transform_3(%arg0: i32, %arg1: i32) -> (i32, i32) {
    %c0_i32 = arith.constant 0 : i32
    %c0_i32_0 = arith.constant 0 : i32
    return %arg0, %c0_i32 : i32, i32
  }
}

</mosaic_0001>

<llo_original>
// kernel: tpu_custom_call.1
$region0: #{tpu_custom_call.1}
  #allocation0 [shape = 'u32[]', space=smem, size = 0x4, offset = 0x4, fixed_abs, tag = 'smem constant byte address 0x4 - core index']
  #allocation1 [shape = 'u32[144,128]{1,0:T(1,128)}', space=vmem, size = 0x12000, scoped, tag = 'internal scratch']
  %s0 = inlined_call_operand.vmem [shape: f32[16,128], index: 0, kind: input, shape index: {}]
  %s1 = inlined_call_operand.hbm [shape: f32[16,128], index: 1, kind: input, shape index: {}]
  %s2 = inlined_call_operand.vmem [shape: f32[16,1], index: 2, kind: input, shape index: {}]
  %s3 = inlined_call_operand.hbm [shape: f32[256,128], index: 3, kind: output, shape index: {}]
  %s4 = sld [smem:[#allocation0]]
  $region38: #{tpu_custom_call.1} parent=0
    _
  %s6 = ssub.s32 1, %s4
  %s7 = scalar_select 0, %s6, %s4
  $region1: #{tpu_custom_call.1} parent=0
    #allocation2 [shape = 'u8[131072]{0}', space=vmem, size = 0x20000, scoped, tag = 'input window, operand 1, single buffered']
    #allocation3 [shape = 's32[1]{0}', space=sflag, size = 0x4, scoped, tag = 'scoped memory for tpu_custom_call.1']
    #allocation4 [shape = 's32[1]{0}', space=sflag, size = 0x4, scoped, tag = 'scoped memory for tpu_custom_call.1']
    #allocation5 [shape = 'u8[131072]{0}', space=vmem, size = 0x20000, scoped, tag = 'output window, operand 0, single buffered']
    %8 = vsyncpa [#allocation3], 0
    %9 = vsyncpa [#allocation4], 0
    // Predicated region
    $region2: #{tpu_custom_call.1} parent=1 // pred_check
      _
    $region3: #{tpu_custom_call.1} parent=1 // pred_check_branch
      %11 = sbr.rel (0) target = $region5
    $region4: #{tpu_custom_call.1} parent=1 // pred_region
      %s12 = sadd.s32 0, 0
      %s13 = smul.u32 32, %s12
      %s14 = ssub.s32 2, %s13
      %s15 = smul.u32 128, %s14
      %p16 = scmp.lt.s32.totalorder %s13, 1
      %s17 = scalar_select %p16, %s13, 1
      %s18 = smul.addr %s17, 8
      %s19 = scalar_lea.vmem %s0, %s18
      %s20 = sadd.s32 0, 0
      %s21 = smul.u32 32, %s20
      %s22 = ssub.s32 2, %s21
      %s23 = smul.u32 128, %s22
    $region5: #{tpu_custom_call.1} parent=1 // pred_fallthru
      _
    // Predicated region
    $region6: #{tpu_custom_call.1} parent=1 // pred_check
      _
    $region7: #{tpu_custom_call.1} parent=1 // pred_check_branch
      %25 = sbr.rel (0) target = $region9
    $region8: #{tpu_custom_call.1} parent=1 // pred_region
      %s26 = sadd.s32 0, 0
      %s27 = smul.u32 32, %s26
      %s28 = ssub.s32 2, %s27
      %s29 = smul.u32 128, %s28
      %s31 = ssub.s32 4096, %s29
      %32 = vsyncadd [#allocation3], %s31
      %p33 = scmp.ne.s32.totalorder 0, %s29
      %s34 = smul.addr %s27, 128
      %s35 = scalar_lea.hbm %s1, %s34
      %s36 = smul.u32 8, %s28
      %s37 = sshll.u32 [#allocation2], 4
      %s38 = int_to_ptr.vmem [resolvable:$true] %s37
      %s39 = sshll.u32 %s36, 4
      %43 = dma.hbm_to_vmem [thread:$0]  (%p33), %s35, %s39, %s38, [#allocation3], 128, 128, 8
    $region9: #{tpu_custom_call.1} parent=1 // pred_fallthru
      _
    // Predicated region
    $region10: #{tpu_custom_call.1} parent=1 // pred_check
      _
    $region11: #{tpu_custom_call.1} parent=1 // pred_check_branch
      %45 = sbr.rel (0) target = $region13
    $region12: #{tpu_custom_call.1} parent=1 // pred_region
      %s46 = sadd.s32 0, 0
      %s47 = smul.u32 32, %s46
      %s48 = ssub.s32 2, %s47
      %s49 = smul.u32 128, %s48
      %p50 = scmp.lt.s32.totalorder %s47, 1
      %s51 = scalar_select %p50, %s47, 1
      %s52 = smul.addr %s51, 8
      %s53 = scalar_lea.vmem %s2, %s52
      %s54 = sadd.s32 0, 0
      %s55 = smul.u32 32, %s54
      %s56 = ssub.s32 2, %s55
      %s57 = smul.u32 128, %s56
    $region13: #{tpu_custom_call.1} parent=1 // pred_fallthru
      _
    // Predicated region
    $region14: #{tpu_custom_call.1} parent=1 // pred_check
      _
    $region15: #{tpu_custom_call.1} parent=1 // pred_check_branch
      %59 = sbr.rel (0) target = $region17
    $region16: #{tpu_custom_call.1} parent=1 // pred_region
      %60 = dma.done [#allocation3], 4096
    $region17: #{tpu_custom_call.1} parent=1 // pred_fallthru
      _
    %s61 = sadd.s32 0, 0
    %s62 = smul.u32 32, %s61
    %s63 = ssub.s32 2, %s62
    %s64 = smul.u32 128, %s63
    %p65 = scmp.lt.s32.totalorder %s62, 1
    %s66 = scalar_select %p65, %s62, 1
    %s67 = smul.addr %s66, 8
    %s68 = scalar_lea.vmem %s0, %s67
    %s69 = sadd.s32 0, 0
    %s70 = smul.u32 32, %s69
    %s71 = ssub.s32 2, %s70
    %s72 = smul.u32 128, %s71
    %p73 = scmp.lt.s32.totalorder %s70, 1
    %s74 = scalar_select %p73, %s70, 1
    %s75 = smul.addr %s74, 8
    %s76 = scalar_lea.vmem %s2, %s75
    %s77 = sadd.s32 0, 0
    %s78 = smul.u32 32, %s77
    %s79 = ssub.s32 2, %s78
    %s80 = smul.u32 128, %s79
    %p81 = scmp.lt.s32.totalorder %s78, 1
    %s82 = scalar_select %p81, %s78, 1
    %s83 = smul.addr %s82, 8
    %s84 = scalar_lea.vmem %s0, %s83
    %s85 = sadd.s32 0, 0
    %s86 = smul.u32 32, %s85
    %s87 = ssub.s32 2, %s86
    %s88 = smul.u32 128, %s87
    %s89 = sadd.s32 0, 0
    %s90 = smul.u32 32, %s89
    %s91 = ssub.s32 2, %s90
    %s92 = smul.u32 128, %s91
    %s93 = sadd.s32 0, 0
    %s94 = smul.u32 32, %s93
    %s95 = ssub.s32 2, %s94
    %s96 = smul.u32 128, %s95
    %p97 = scmp.lt.s32.totalorder %s94, 1
    %s98 = scalar_select %p97, %s94, 1
    %s99 = smul.addr %s98, 8
    %s100 = scalar_lea.vmem %s2, %s99
    %s101 = sadd.s32 0, 0
    %s102 = smul.u32 32, %s101
    %s103 = ssub.s32 2, %s102
    %s104 = smul.u32 128, %s103
    %p105 = scmp.eq.s32.totalorder 0, 0
    // Predicated region
    $region18: #{tpu_custom_call.1} parent=1 // pred_check
      %p106 = pneg %p105
    $region19: #{tpu_custom_call.1} parent=1 // pred_check_branch
      %108 = sbr.rel (%p106) target = $region21
    $region20: #{tpu_custom_call.1} parent=1 // pred_region
      %109 = vst [vmem:[#allocation5] sm:$0xff] 0.0
      %110 = vst [vmem:[#allocation5 + $0x8] sm:$0xff] 0.0
      %111 = vst [vmem:[#allocation5 + $0x10] sm:$0xff] 0.0
      %112 = vst [vmem:[#allocation5 + $0x18] sm:$0xff] 0.0
      %113 = vst [vmem:[#allocation5 + $0x20] sm:$0xff] 0.0
      %114 = vst [vmem:[#allocation5 + $0x28] sm:$0xff] 0.0
      %115 = vst [vmem:[#allocation5 + $0x30] sm:$0xff] 0.0
      %116 = vst [vmem:[#allocation5 + $0x38] sm:$0xff] 0.0
      %117 = vst [vmem:[#allocation5 + $0x40] sm:$0xff] 0.0
      %118 = vst [vmem:[#allocation5 + $0x48] sm:$0xff] 0.0
      %119 = vst [vmem:[#allocation5 + $0x50] sm:$0xff] 0.0
      %120 = vst [vmem:[#allocation5 + $0x58] sm:$0xff] 0.0
      %121 = vst [vmem:[#allocation5 + $0x60] sm:$0xff] 0.0
      %122 = vst [vmem:[#allocation5 + $0x68] sm:$0xff] 0.0
      %123 = vst [vmem:[#allocation5 + $0x70] sm:$0xff] 0.0
      %124 = vst [vmem:[#allocation5 + $0x78] sm:$0xff] 0.0
      %125 = vst [vmem:[#allocation5 + $0x80] sm:$0xff] 0.0
      %126 = vst [vmem:[#allocation5 + $0x88] sm:$0xff] 0.0
      %127 = vst [vmem:[#allocation5 + $0x90] sm:$0xff] 0.0
      %128 = vst [vmem:[#allocation5 + $0x98] sm:$0xff] 0.0
      %129 = vst [vmem:[#allocation5 + $0xa0] sm:$0xff] 0.0
      %130 = vst [vmem:[#allocation5 + $0xa8] sm:$0xff] 0.0
      %131 = vst [vmem:[#allocation5 + $0xb0] sm:$0xff] 0.0
      %132 = vst [vmem:[#allocation5 + $0xb8] sm:$0xff] 0.0
      %133 = vst [vmem:[#allocation5 + $0xc0] sm:$0xff] 0.0
      %134 = vst [vmem:[#allocation5 + $0xc8] sm:$0xff] 0.0
      %135 = vst [vmem:[#allocation5 + $0xd0] sm:$0xff] 0.0
      %136 = vst [vmem:[#allocation5 + $0xd8] sm:$0xff] 0.0
      %137 = vst [vmem:[#allocation5 + $0xe0] sm:$0xff] 0.0
      %138 = vst [vmem:[#allocation5 + $0xe8] sm:$0xff] 0.0
      %139 = vst [vmem:[#allocation5 + $0xf0] sm:$0xff] 0.0
      %140 = vst [vmem:[#allocation5 + $0xf8] sm:$0xff] 0.0
    $region21: #{tpu_custom_call.1} parent=1 // pred_fallthru
      _
    %v141 = vld [vmem:[%s84] sm:$0xff]
    %v142 = vld [vmem:[%s84 + $0x8] sm:$0xff]
    %v143 = vld [vmem:[%s84 + $0x10] sm:$0xff]
    %v144 = vld [vmem:[%s84 + $0x18] sm:$0xff]
    %v145 = vld [vmem:[%s84 + $0x20] sm:$0xff]
    %v146 = vld [vmem:[%s84 + $0x28] sm:$0xff]
    %v147 = vld [vmem:[%s84 + $0x30] sm:$0xff]
    %v148 = vld [vmem:[%s84 + $0x38] sm:$0xff]
    %v149 = vld [vmem:[%s84 + $0x40] sm:$0xff]
    %v150 = vld [vmem:[%s84 + $0x48] sm:$0xff]
    %v151 = vld [vmem:[%s84 + $0x50] sm:$0xff]
    %v152 = vld [vmem:[%s84 + $0x58] sm:$0xff]
    %v153 = vld [vmem:[%s84 + $0x60] sm:$0xff]
    %v154 = vld [vmem:[%s84 + $0x68] sm:$0xff]
    %v155 = vld [vmem:[%s84 + $0x70] sm:$0xff]
    %v156 = vld [vmem:[%s84 + $0x78] sm:$0xff]
    %v157 = vld [vmem:[%s84 + $0x80] sm:$0xff]
    %v158 = vld [vmem:[%s84 + $0x88] sm:$0xff]
    %v159 = vld [vmem:[%s84 + $0x90] sm:$0xff]
    %v160 = vld [vmem:[%s84 + $0x98] sm:$0xff]
    %v161 = vld [vmem:[%s84 + $0xa0] sm:$0xff]
    %v162 = vld [vmem:[%s84 + $0xa8] sm:$0xff]
    %v163 = vld [vmem:[%s84 + $0xb0] sm:$0xff]
    %v164 = vld [vmem:[%s84 + $0xb8] sm:$0xff]
    %v165 = vld [vmem:[%s84 + $0xc0] sm:$0xff]
    %v166 = vld [vmem:[%s84 + $0xc8] sm:$0xff]
    %v167 = vld [vmem:[%s84 + $0xd0] sm:$0xff]
    %v168 = vld [vmem:[%s84 + $0xd8] sm:$0xff]
    %v169 = vld [vmem:[%s84 + $0xe0] sm:$0xff]
    %v170 = vld [vmem:[%s84 + $0xe8] sm:$0xff]
    %v171 = vld [vmem:[%s84 + $0xf0] sm:$0xff]
    %v172 = vld [vmem:[%s84 + $0xf8] sm:$0xff]
    %v173 = vld [vmem:[#allocation2] sm:$0xff]
    %v174 = vld [vmem:[#allocation2 + $0x8] sm:$0xff]
    %v175 = vld [vmem:[#allocation2 + $0x10] sm:$0xff]
    %v176 = vld [vmem:[#allocation2 + $0x18] sm:$0xff]
    %v177 = vld [vmem:[#allocation2 + $0x20] sm:$0xff]
    %v178 = vld [vmem:[#allocation2 + $0x28] sm:$0xff]
    %v179 = vld [vmem:[#allocation2 + $0x30] sm:$0xff]
    %v180 = vld [vmem:[#allocation2 + $0x38] sm:$0xff]
    %v181 = vld [vmem:[#allocation2 + $0x40] sm:$0xff]
    %v182 = vld [vmem:[#allocation2 + $0x48] sm:$0xff]
    %v183 = vld [vmem:[#allocation2 + $0x50] sm:$0xff]
    %v184 = vld [vmem:[#allocation2 + $0x58] sm:$0xff]
    %v185 = vld [vmem:[#allocation2 + $0x60] sm:$0xff]
    %v186 = vld [vmem:[#allocation2 + $0x68] sm:$0xff]
    %v187 = vld [vmem:[#allocation2 + $0x70] sm:$0xff]
    %v188 = vld [vmem:[#allocation2 + $0x78] sm:$0xff]
    %v189 = vld [vmem:[#allocation2 + $0x80] sm:$0xff]
    %v190 = vld [vmem:[#allocation2 + $0x88] sm:$0xff]
    %v191 = vld [vmem:[#allocation2 + $0x90] sm:$0xff]
    %v192 = vld [vmem:[#allocation2 + $0x98] sm:$0xff]
    %v193 = vld [vmem:[#allocation2 + $0xa0] sm:$0xff]
    %v194 = vld [vmem:[#allocation2 + $0xa8] sm:$0xff]
    %v195 = vld [vmem:[#allocation2 + $0xb0] sm:$0xff]
    %v196 = vld [vmem:[#allocation2 + $0xb8] sm:$0xff]
    %v197 = vld [vmem:[#allocation2 + $0xc0] sm:$0xff]
    %v198 = vld [vmem:[#allocation2 + $0xc8] sm:$0xff]
    %v199 = vld [vmem:[#allocation2 + $0xd0] sm:$0xff]
    %v200 = vld [vmem:[#allocation2 + $0xd8] sm:$0xff]
    %v201 = vld [vmem:[#allocation2 + $0xe0] sm:$0xff]
    %v202 = vld [vmem:[#allocation2 + $0xe8] sm:$0xff]
    %v203 = vld [vmem:[#allocation2 + $0xf0] sm:$0xff]
    %v204 = vld [vmem:[#allocation2 + $0xf8] sm:$0xff]
    %v205 = vsub.f32 0.0, %v141
    %v206 = vsub.f32 0.0, %v142
    %v207 = vsub.f32 0.0, %v143
    %v208 = vsub.f32 0.0, %v144
    %v209 = vsub.f32 0.0, %v145
    %v210 = vsub.f32 0.0, %v146
    %v211 = vsub.f32 0.0, %v147
    %v212 = vsub.f32 0.0, %v148
    %v213 = vsub.f32 0.0, %v149
    %v214 = vsub.f32 0.0, %v150
    %v215 = vsub.f32 0.0, %v151
    %v216 = vsub.f32 0.0, %v152
    %v217 = vsub.f32 0.0, %v153
    %v218 = vsub.f32 0.0, %v154
    %v219 = vsub.f32 0.0, %v155
    %v220 = vsub.f32 0.0, %v156
    %v221 = vsub.f32 0.0, %v157
    %v222 = vsub.f32 0.0, %v158
    %v223 = vsub.f32 0.0, %v159
    %v224 = vsub.f32 0.0, %v160
    %v225 = vsub.f32 0.0, %v161
    %v226 = vsub.f32 0.0, %v162
    %v227 = vsub.f32 0.0, %v163
    %v228 = vsub.f32 0.0, %v164
    %v229 = vsub.f32 0.0, %v165
    %v230 = vsub.f32 0.0, %v166
    %v231 = vsub.f32 0.0, %v167
    %v232 = vsub.f32 0.0, %v168
    %v233 = vsub.f32 0.0, %v169
    %v234 = vsub.f32 0.0, %v170
    %v235 = vsub.f32 0.0, %v171
    %v236 = vsub.f32 0.0, %v172
    %v237 = vmax.f32 %v205, 0.0
    %v238 = vmax.f32 %v206, 0.0
    %v239 = vmax.f32 %v207, 0.0
    %v240 = vmax.f32 %v208, 0.0
    %v241 = vmax.f32 %v209, 0.0
    %v242 = vmax.f32 %v210, 0.0
    %v243 = vmax.f32 %v211, 0.0
    %v244 = vmax.f32 %v212, 0.0
    %v245 = vmax.f32 %v213, 0.0
    %v246 = vmax.f32 %v214, 0.0
    %v247 = vmax.f32 %v215, 0.0
    %v248 = vmax.f32 %v216, 0.0
    %v249 = vmax.f32 %v217, 0.0
    %v250 = vmax.f32 %v218, 0.0
    %v251 = vmax.f32 %v219, 0.0
    %v252 = vmax.f32 %v220, 0.0
    %v253 = vmax.f32 %v221, 0.0
    %v254 = vmax.f32 %v222, 0.0
    %v255 = vmax.f32 %v223, 0.0
    %v256 = vmax.f32 %v224, 0.0
    %v257 = vmax.f32 %v225, 0.0
    %v258 = vmax.f32 %v226, 0.0
    %v259 = vmax.f32 %v227, 0.0
    %v260 = vmax.f32 %v228, 0.0
    %v261 = vmax.f32 %v229, 0.0
    %v262 = vmax.f32 %v230, 0.0
    %v263 = vmax.f32 %v231, 0.0
    %v264 = vmax.f32 %v232, 0.0
    %v265 = vmax.f32 %v233, 0.0
    %v266 = vmax.f32 %v234, 0.0
    %v267 = vmax.f32 %v235, 0.0
    %v268 = vmax.f32 %v236, 0.0
    %v269 = vand.u32 2147483647, %v141
    %v270 = vand.u32 2147483647, %v142
    %v271 = vand.u32 2147483647, %v143
    %v272 = vand.u32 2147483647, %v144
    %v273 = vand.u32 2147483647, %v145
    %v274 = vand.u32 2147483647, %v146
    %v275 = vand.u32 2147483647, %v147
    %v276 = vand.u32 2147483647, %v148
    %v277 = vand.u32 2147483647, %v149
    %v278 = vand.u32 2147483647, %v150
    %v279 = vand.u32 2147483647, %v151
    %v280 = vand.u32 2147483647, %v152
    %v281 = vand.u32 2147483647, %v153
    %v282 = vand.u32 2147483647, %v154
    %v283 = vand.u32 2147483647, %v155
    %v284 = vand.u32 2147483647, %v156
    %v285 = vand.u32 2147483647, %v157
    %v286 = vand.u32 2147483647, %v158
    %v287 = vand.u32 2147483647, %v159
    %v288 = vand.u32 2147483647, %v160
    %v289 = vand.u32 2147483647, %v161
    %v290 = vand.u32 2147483647, %v162
    %v291 = vand.u32 2147483647, %v163
    %v292 = vand.u32 2147483647, %v164
    %v293 = vand.u32 2147483647, %v165
    %v294 = vand.u32 2147483647, %v166
    %v295 = vand.u32 2147483647, %v167
    %v296 = vand.u32 2147483647, %v168
    %v297 = vand.u32 2147483647, %v169
    %v298 = vand.u32 2147483647, %v170
    %v299 = vand.u32 2147483647, %v171
    %v300 = vand.u32 2147483647, %v172
    %v301 = vsub.f32 0.0, %v269
    %v302 = vsub.f32 0.0, %v270
    %v303 = vsub.f32 0.0, %v271
    %v304 = vsub.f32 0.0, %v272
    %v305 = vsub.f32 0.0, %v273
    %v306 = vsub.f32 0.0, %v274
    %v307 = vsub.f32 0.0, %v275
    %v308 = vsub.f32 0.0, %v276
    %v309 = vsub.f32 0.0, %v277
    %v310 = vsub.f32 0.0, %v278
    %v311 = vsub.f32 0.0, %v279
    %v312 = vsub.f32 0.0, %v280
    %v313 = vsub.f32 0.0, %v281
    %v314 = vsub.f32 0.0, %v282
    %v315 = vsub.f32 0.0, %v283
    %v316 = vsub.f32 0.0, %v284
    %v317 = vsub.f32 0.0, %v285
    %v318 = vsub.f32 0.0, %v286
    %v319 = vsub.f32 0.0, %v287
    %v320 = vsub.f32 0.0, %v288
    %v321 = vsub.f32 0.0, %v289
    %v322 = vsub.f32 0.0, %v290
    %v323 = vsub.f32 0.0, %v291
    %v324 = vsub.f32 0.0, %v292
    %v325 = vsub.f32 0.0, %v293
    %v326 = vsub.f32 0.0, %v294
    %v327 = vsub.f32 0.0, %v295
    %v328 = vsub.f32 0.0, %v296
    %v329 = vsub.f32 0.0, %v297
    %v330 = vsub.f32 0.0, %v298
    %v331 = vsub.f32 0.0, %v299
    %v332 = vsub.f32 0.0, %v300
    %v333 = vmul.f32 %v301, 1.442695
    %v334 = vpow.pop %v333
    %v335 = vmul.f32 %v302, 1.442695
    %v336 = vpow.pop %v335
    %v337 = vmul.f32 %v303, 1.442695
    %v338 = vpow.pop %v337
    %v339 = vmul.f32 %v304, 1.442695
    %v340 = vpow.pop %v339
    %v341 = vmul.f32 %v305, 1.442695
    %v342 = vpow.pop %v341
    %v343 = vmul.f32 %v306, 1.442695
    %v344 = vpow.pop %v343
    %v345 = vmul.f32 %v307, 1.442695
    %v346 = vpow.pop %v345
    %v347 = vmul.f32 %v308, 1.442695
    %v348 = vpow.pop %v347
    %v349 = vmul.f32 %v309, 1.442695
    %v350 = vpow.pop %v349
    %v351 = vmul.f32 %v310, 1.442695
    %v352 = vpow.pop %v351
    %v353 = vmul.f32 %v311, 1.442695
    %v354 = vpow.pop %v353
    %v355 = vmul.f32 %v312, 1.442695
    %v356 = vpow.pop %v355
    %v357 = vmul.f32 %v313, 1.442695
    %v358 = vpow.pop %v357
    %v359 = vmul.f32 %v314, 1.442695
    %v360 = vpow.pop %v359
    %v361 = vmul.f32 %v315, 1.442695
    %v362 = vpow.pop %v361
    %v363 = vmul.f32 %v316, 1.442695
    %v364 = vpow.pop %v363
    %v365 = vmul.f32 %v317, 1.442695
    %v366 = vpow.pop %v365
    %v367 = vmul.f32 %v318, 1.442695
    %v368 = vpow.pop %v367
    %v369 = vmul.f32 %v319, 1.442695
    %v370 = vpow.pop %v369
    %v371 = vmul.f32 %v320, 1.442695
    %v372 = vpow.pop %v371
    %v373 = vmul.f32 %v321, 1.442695
    %v374 = vpow.pop %v373
    %v375 = vmul.f32 %v322, 1.442695
    %v376 = vpow.pop %v375
    %v377 = vmul.f32 %v323, 1.442695
    %v378 = vpow.pop %v377
    %v379 = vmul.f32 %v324, 1.442695
    %v380 = vpow.pop %v379
    %v381 = vmul.f32 %v325, 1.442695
    %v382 = vpow.pop %v381
    %v383 = vmul.f32 %v326, 1.442695
    %v384 = vpow.pop %v383
    %v385 = vmul.f32 %v327, 1.442695
    %v386 = vpow.pop %v385
    %v387 = vmul.f32 %v328, 1.442695
    %v388 = vpow.pop %v387
    %v389 = vmul.f32 %v329, 1.442695
    %v390 = vpow.pop %v389
    %v391 = vmul.f32 %v330, 1.442695
    %v392 = vpow.pop %v391
    %v393 = vmul.f32 %v331, 1.442695
    %v394 = vpow.pop %v393
    %v395 = vmul.f32 %v332, 1.442695
    %v396 = vpow.pop %v395
    %v397 = vadd.f32 %v334, 1.0
    %v398 = vlog2.pop %v397
    %v399 = vmul.f32 %v398, 0.6931472
    %v400 = vmul.f32 -0.5, %v334
    %v401 = vadd.f32 %v400, 1.0
    %v402 = vmul.f32 %v401, %v334
    %v403 = vand.u32 2147483647, %v334
    %vm404 = vcmp.lt.f32.partialorder %v403, 0.0004427343
    %v405 = vsel %vm404, %v402, %v399
    %v406 = vadd.f32 %v336, 1.0
    %v407 = vlog2.pop %v406
    %v408 = vmul.f32 %v407, 0.6931472
    %v409 = vmul.f32 -0.5, %v336
    %v410 = vadd.f32 %v409, 1.0
    %v411 = vmul.f32 %v410, %v336
    %v412 = vand.u32 2147483647, %v336
    %vm413 = vcmp.lt.f32.partialorder %v412, 0.0004427343
    %v414 = vsel %vm413, %v411, %v408
    %v415 = vadd.f32 %v338, 1.0
    %v416 = vlog2.pop %v415
    %v417 = vmul.f32 %v416, 0.6931472
    %v418 = vmul.f32 -0.5, %v338
    %v419 = vadd.f32 %v418, 1.0
    %v420 = vmul.f32 %v419, %v338
    %v421 = vand.u32 2147483647, %v338
    %vm422 = vcmp.lt.f32.partialorder %v421, 0.0004427343
    %v423 = vsel %vm422, %v420, %v417
    %v424 = vadd.f32 %v340, 1.0
    %v425 = vlog2.pop %v424
    %v426 = vmul.f32 %v425, 0.6931472
    %v427 = vmul.f32 -0.5, %v340
    %v428 = vadd.f32 %v427, 1.0
    %v429 = vmul.f32 %v428, %v340
    %v430 = vand.u32 2147483647, %v340
    %vm431 = vcmp.lt.f32.partialorder %v430, 0.0004427343
    %v432 = vsel %vm431, %v429, %v426
    %v433 = vadd.f32 %v342, 1.0
    %v434 = vlog2.pop %v433
    %v435 = vmul.f32 %v434, 0.6931472
    %v436 = vmul.f32 -0.5, %v342
    %v437 = vadd.f32 %v436, 1.0
    %v438 = vmul.f32 %v437, %v342
    %v439 = vand.u32 2147483647, %v342
    %vm440 = vcmp.lt.f32.partialorder %v439, 0.0004427343
    %v441 = vsel %vm440, %v438, %v435
    %v442 = vadd.f32 %v344, 1.0
    %v443 = vlog2.pop %v442
    %v444 = vmul.f32 %v443, 0.6931472
    %v445 = vmul.f32 -0.5, %v344
    %v446 = vadd.f32 %v445, 1.0
    %v447 = vmul.f32 %v446, %v344
    %v448 = vand.u32 2147483647, %v344
    %vm449 = vcmp.lt.f32.partialorder %v448, 0.0004427343
    %v450 = vsel %vm449, %v447, %v444
    %v451 = vadd.f32 %v346, 1.0
    %v452 = vlog2.pop %v451
    %v453 = vmul.f32 %v452, 0.6931472
    %v454 = vmul.f32 -0.5, %v346
    %v455 = vadd.f32 %v454, 1.0
    %v456 = vmul.f32 %v455, %v346
    %v457 = vand.u32 2147483647, %v346
    %vm458 = vcmp.lt.f32.partialorder %v457, 0.0004427343
    %v459 = vsel %vm458, %v456, %v453
    %v460 = vadd.f32 %v348, 1.0
    %v461 = vlog2.pop %v460
    %v462 = vmul.f32 %v461, 0.6931472
    %v463 = vmul.f32 -0.5, %v348
    %v464 = vadd.f32 %v463, 1.0
    %v465 = vmul.f32 %v464, %v348
    %v466 = vand.u32 2147483647, %v348
    %vm467 = vcmp.lt.f32.partialorder %v466, 0.0004427343
    %v468 = vsel %vm467, %v465, %v462
    %v469 = vadd.f32 %v350, 1.0
    %v470 = vlog2.pop %v469
    %v471 = vmul.f32 %v470, 0.6931472
    %v472 = vmul.f32 -0.5, %v350
    %v473 = vadd.f32 %v472, 1.0
    %v474 = vmul.f32 %v473, %v350
    %v475 = vand.u32 2147483647, %v350
    %vm476 = vcmp.lt.f32.partialorder %v475, 0.0004427343
    %v477 = vsel %vm476, %v474, %v471
    %v478 = vadd.f32 %v352, 1.0
    %v479 = vlog2.pop %v478
    %v480 = vmul.f32 %v479, 0.6931472
    %v481 = vmul.f32 -0.5, %v352
    %v482 = vadd.f32 %v481, 1.0
    %v483 = vmul.f32 %v482, %v352
    %v484 = vand.u32 2147483647, %v352
    %vm485 = vcmp.lt.f32.partialorder %v484, 0.0004427343
    %v486 = vsel %vm485, %v483, %v480
    %v487 = vadd.f32 %v354, 1.0
    %v488 = vlog2.pop %v487
    %v489 = vmul.f32 %v488, 0.6931472
    %v490 = vmul.f32 -0.5, %v354
    %v491 = vadd.f32 %v490, 1.0
    %v492 = vmul.f32 %v491, %v354
    %v493 = vand.u32 2147483647, %v354
    %vm494 = vcmp.lt.f32.partialorder %v493, 0.0004427343
    %v495 = vsel %vm494, %v492, %v489
    %v496 = vadd.f32 %v356, 1.0
    %v497 = vlog2.pop %v496
    %v498 = vmul.f32 %v497, 0.6931472
    %v499 = vmul.f32 -0.5, %v356
    %v500 = vadd.f32 %v499, 1.0
    %v501 = vmul.f32 %v500, %v356
    %v502 = vand.u32 2147483647, %v356
    %vm503 = vcmp.lt.f32.partialorder %v502, 0.0004427343
    %v504 = vsel %vm503, %v501, %v498
    %v505 = vadd.f32 %v358, 1.0
    %v506 = vlog2.pop %v505
    %v507 = vmul.f32 %v506, 0.6931472
    %v508 = vmul.f32 -0.5, %v358
    %v509 = vadd.f32 %v508, 1.0
    %v510 = vmul.f32 %v509, %v358
    %v511 = vand.u32 2147483647, %v358
    %vm512 = vcmp.lt.f32.partialorder %v511, 0.0004427343
    %v513 = vsel %vm512, %v510, %v507
    %v514 = vadd.f32 %v360, 1.0
    %v515 = vlog2.pop %v514
    %v516 = vmul.f32 %v515, 0.6931472
    %v517 = vmul.f32 -0.5, %v360
    %v518 = vadd.f32 %v517, 1.0
    %v519 = vmul.f32 %v518, %v360
    %v520 = vand.u32 2147483647, %v360
    %vm521 = vcmp.lt.f32.partialorder %v520, 0.0004427343
    %v522 = vsel %vm521, %v519, %v516
    %v523 = vadd.f32 %v362, 1.0
    %v524 = vlog2.pop %v523
    %v525 = vmul.f32 %v524, 0.6931472
    %v526 = vmul.f32 -0.5, %v362
    %v527 = vadd.f32 %v526, 1.0
    %v528 = vmul.f32 %v527, %v362
    %v529 = vand.u32 2147483647, %v362
    %vm530 = vcmp.lt.f32.partialorder %v529, 0.0004427343
    %v531 = vsel %vm530, %v528, %v525
    %v532 = vadd.f32 %v364, 1.0
    %v533 = vlog2.pop %v532
    %v534 = vmul.f32 %v533, 0.6931472
    %v535 = vmul.f32 -0.5, %v364
    %v536 = vadd.f32 %v535, 1.0
    %v537 = vmul.f32 %v536, %v364
    %v538 = vand.u32 2147483647, %v364
    %vm539 = vcmp.lt.f32.partialorder %v538, 0.0004427343
    %v540 = vsel %vm539, %v537, %v534
    %v541 = vadd.f32 %v366, 1.0
    %v542 = vlog2.pop %v541
    %v543 = vmul.f32 %v542, 0.6931472
    %v544 = vmul.f32 -0.5, %v366
    %v545 = vadd.f32 %v544, 1.0
    %v546 = vmul.f32 %v545, %v366
    %v547 = vand.u32 2147483647, %v366
    %vm548 = vcmp.lt.f32.partialorder %v547, 0.0004427343
    %v549 = vsel %vm548, %v546, %v543
    %v550 = vadd.f32 %v368, 1.0
    %v551 = vlog2.pop %v550
    %v552 = vmul.f32 %v551, 0.6931472
    %v553 = vmul.f32 -0.5, %v368
    %v554 = vadd.f32 %v553, 1.0
    %v555 = vmul.f32 %v554, %v368
    %v556 = vand.u32 2147483647, %v368
    %vm557 = vcmp.lt.f32.partialorder %v556, 0.0004427343
    %v558 = vsel %vm557, %v555, %v552
    %v559 = vadd.f32 %v370, 1.0
    %v560 = vlog2.pop %v559
    %v561 = vmul.f32 %v560, 0.6931472
    %v562 = vmul.f32 -0.5, %v370
    %v563 = vadd.f32 %v562, 1.0
    %v564 = vmul.f32 %v563, %v370
    %v565 = vand.u32 2147483647, %v370
    %vm566 = vcmp.lt.f32.partialorder %v565, 0.0004427343
    %v567 = vsel %vm566, %v564, %v561
    %v568 = vadd.f32 %v372, 1.0
    %v569 = vlog2.pop %v568
    %v570 = vmul.f32 %v569, 0.6931472
    %v571 = vmul.f32 -0.5, %v372
    %v572 = vadd.f32 %v571, 1.0
    %v573 = vmul.f32 %v572, %v372
    %v574 = vand.u32 2147483647, %v372
    %vm575 = vcmp.lt.f32.partialorder %v574, 0.0004427343
    %v576 = vsel %vm575, %v573, %v570
    %v577 = vadd.f32 %v374, 1.0
    %v578 = vlog2.pop %v577
    %v579 = vmul.f32 %v578, 0.6931472
    %v580 = vmul.f32 -0.5, %v374
    %v581 = vadd.f32 %v580, 1.0
    %v582 = vmul.f32 %v581, %v374
    %v583 = vand.u32 2147483647, %v374
    %vm584 = vcmp.lt.f32.partialorder %v583, 0.0004427343
    %v585 = vsel %vm584, %v582, %v579
    %v586 = vadd.f32 %v376, 1.0
    %v587 = vlog2.pop %v586
    %v588 = vmul.f32 %v587, 0.6931472
    %v589 = vmul.f32 -0.5, %v376
    %v590 = vadd.f32 %v589, 1.0
    %v591 = vmul.f32 %v590, %v376
    %v592 = vand.u32 2147483647, %v376
    %vm593 = vcmp.lt.f32.partialorder %v592, 0.0004427343
    %v594 = vsel %vm593, %v591, %v588
    %v595 = vadd.f32 %v378, 1.0
    %v596 = vlog2.pop %v595
    %v597 = vmul.f32 %v596, 0.6931472
    %v598 = vmul.f32 -0.5, %v378
    %v599 = vadd.f32 %v598, 1.0
    %v600 = vmul.f32 %v599, %v378
    %v601 = vand.u32 2147483647, %v378
    %vm602 = vcmp.lt.f32.partialorder %v601, 0.0004427343
    %v603 = vsel %vm602, %v600, %v597
    %v604 = vadd.f32 %v380, 1.0
    %v605 = vlog2.pop %v604
    %v606 = vmul.f32 %v605, 0.6931472
    %v607 = vmul.f32 -0.5, %v380
    %v608 = vadd.f32 %v607, 1.0
    %v609 = vmul.f32 %v608, %v380
    %v610 = vand.u32 2147483647, %v380
    %vm611 = vcmp.lt.f32.partialorder %v610, 0.0004427343
    %v612 = vsel %vm611, %v609, %v606
    %v613 = vadd.f32 %v382, 1.0
    %v614 = vlog2.pop %v613
    %v615 = vmul.f32 %v614, 0.6931472
    %v616 = vmul.f32 -0.5, %v382
    %v617 = vadd.f32 %v616, 1.0
    %v618 = vmul.f32 %v617, %v382
    %v619 = vand.u32 2147483647, %v382
    %vm620 = vcmp.lt.f32.partialorder %v619, 0.0004427343
    %v621 = vsel %vm620, %v618, %v615
    %v622 = vadd.f32 %v384, 1.0
    %v623 = vlog2.pop %v622
    %v624 = vmul.f32 %v623, 0.6931472
    %v625 = vmul.f32 -0.5, %v384
    %v626 = vadd.f32 %v625, 1.0
    %v627 = vmul.f32 %v626, %v384
    %v628 = vand.u32 2147483647, %v384
    %vm629 = vcmp.lt.f32.partialorder %v628, 0.0004427343
    %v630 = vsel %vm629, %v627, %v624
    %v631 = vadd.f32 %v386, 1.0
    %v632 = vlog2.pop %v631
    %v633 = vmul.f32 %v632, 0.6931472
    %v634 = vmul.f32 -0.5, %v386
    %v635 = vadd.f32 %v634, 1.0
    %v636 = vmul.f32 %v635, %v386
    %v637 = vand.u32 2147483647, %v386
    %vm638 = vcmp.lt.f32.partialorder %v637, 0.0004427343
    %v639 = vsel %vm638, %v636, %v633
    %v640 = vadd.f32 %v388, 1.0
    %v641 = vlog2.pop %v640
    %v642 = vmul.f32 %v641, 0.6931472
    %v643 = vmul.f32 -0.5, %v388
    %v644 = vadd.f32 %v643, 1.0
    %v645 = vmul.f32 %v644, %v388
    %v646 = vand.u32 2147483647, %v388
    %vm647 = vcmp.lt.f32.partialorder %v646, 0.0004427343
    %v648 = vsel %vm647, %v645, %v642
    %v649 = vadd.f32 %v390, 1.0
    %v650 = vlog2.pop %v649
    %v651 = vmul.f32 %v650, 0.6931472
    %v652 = vmul.f32 -0.5, %v390
    %v653 = vadd.f32 %v652, 1.0
    %v654 = vmul.f32 %v653, %v390
    %v655 = vand.u32 2147483647, %v390
    %vm656 = vcmp.lt.f32.partialorder %v655, 0.0004427343
    %v657 = vsel %vm656, %v654, %v651
    %v658 = vadd.f32 %v392, 1.0
    %v659 = vlog2.pop %v658
    %v660 = vmul.f32 %v659, 0.6931472
    %v661 = vmul.f32 -0.5, %v392
    %v662 = vadd.f32 %v661, 1.0
    %v663 = vmul.f32 %v662, %v392
    %v664 = vand.u32 2147483647, %v392
    %vm665 = vcmp.lt.f32.partialorder %v664, 0.0004427343
    %v666 = vsel %vm665, %v663, %v660
    %v667 = vadd.f32 %v394, 1.0
    %v668 = vlog2.pop %v667
    %v669 = vmul.f32 %v668, 0.6931472
    %v670 = vmul.f32 -0.5, %v394
    %v671 = vadd.f32 %v670, 1.0
    %v672 = vmul.f32 %v671, %v394
    %v673 = vand.u32 2147483647, %v394
    %vm674 = vcmp.lt.f32.partialorder %v673, 0.0004427343
    %v675 = vsel %vm674, %v672, %v669
    %v676 = vadd.f32 %v396, 1.0
    %v677 = vlog2.pop %v676
    %v678 = vmul.f32 %v677, 0.6931472
    %v679 = vmul.f32 -0.5, %v396
    %v680 = vadd.f32 %v679, 1.0
    %v681 = vmul.f32 %v680, %v396
    %v682 = vand.u32 2147483647, %v396
    %vm683 = vcmp.lt.f32.partialorder %v682, 0.0004427343
    %v684 = vsel %vm683, %v681, %v678
    %v685 = vadd.f32 %v237, %v405
    %v686 = vadd.f32 %v238, %v414
    %v687 = vadd.f32 %v239, %v423
    %v688 = vadd.f32 %v240, %v432
    %v689 = vadd.f32 %v241, %v441
    %v690 = vadd.f32 %v242, %v450
    %v691 = vadd.f32 %v243, %v459
    %v692 = vadd.f32 %v244, %v468
    %v693 = vadd.f32 %v245, %v477
    %v694 = vadd.f32 %v246, %v486
    %v695 = vadd.f32 %v247, %v495
    %v696 = vadd.f32 %v248, %v504
    %v697 = vadd.f32 %v249, %v513
    %v698 = vadd.f32 %v250, %v522
    %v699 = vadd.f32 %v251, %v531
    %v700 = vadd.f32 %v252, %v540
    %v701 = vadd.f32 %v253, %v549
    %v702 = vadd.f32 %v254, %v558
    %v703 = vadd.f32 %v255, %v567
    %v704 = vadd.f32 %v256, %v576
    %v705 = vadd.f32 %v257, %v585
    %v706 = vadd.f32 %v258, %v594
    %v707 = vadd.f32 %v259, %v603
    %v708 = vadd.f32 %v260, %v612
    %v709 = vadd.f32 %v261, %v621
    %v710 = vadd.f32 %v262, %v630
    %v711 = vadd.f32 %v263, %v639
    %v712 = vadd.f32 %v264, %v648
    %v713 = vadd.f32 %v265, %v657
    %v714 = vadd.f32 %v266, %v666
    %v715 = vadd.f32 %v267, %v675
    %v716 = vadd.f32 %v268, %v684
    %v717 = vld [vmem:[%s100] sm:$0xff]
    %v718 = vld [vmem:[%s100 + $0x8] sm:$0xff]
    %v719 = vld [vmem:[%s100 + $0x10] sm:$0xff]
    %v720 = vld [vmem:[%s100 + $0x18] sm:$0xff]
    %v721 = vld [vmem:[%s100 + $0x20] sm:$0xff]
    %v722 = vld [vmem:[%s100 + $0x28] sm:$0xff]
    %v723 = vld [vmem:[%s100 + $0x30] sm:$0xff]
    %v724 = vld [vmem:[%s100 + $0x38] sm:$0xff]
    %v725 = vld [vmem:[%s100 + $0x40] sm:$0xff]
    %v726 = vld [vmem:[%s100 + $0x48] sm:$0xff]
    %v727 = vld [vmem:[%s100 + $0x50] sm:$0xff]
    %v728 = vld [vmem:[%s100 + $0x58] sm:$0xff]
    %v729 = vld [vmem:[%s100 + $0x60] sm:$0xff]
    %v730 = vld [vmem:[%s100 + $0x68] sm:$0xff]
    %v731 = vld [vmem:[%s100 + $0x70] sm:$0xff]
    %v732 = vld [vmem:[%s100 + $0x78] sm:$0xff]
    %v733 = vld [vmem:[%s100 + $0x80] sm:$0xff]
    %v734 = vld [vmem:[%s100 + $0x88] sm:$0xff]
    %v735 = vld [vmem:[%s100 + $0x90] sm:$0xff]
    %v736 = vld [vmem:[%s100 + $0x98] sm:$0xff]
    %v737 = vld [vmem:[%s100 + $0xa0] sm:$0xff]
    %v738 = vld [vmem:[%s100 + $0xa8] sm:$0xff]
    %v739 = vld [vmem:[%s100 + $0xb0] sm:$0xff]
    %v740 = vld [vmem:[%s100 + $0xb8] sm:$0xff]
    %v741 = vld [vmem:[%s100 + $0xc0] sm:$0xff]
    %v742 = vld [vmem:[%s100 + $0xc8] sm:$0xff]
    %v743 = vld [vmem:[%s100 + $0xd0] sm:$0xff]
    %v744 = vld [vmem:[%s100 + $0xd8] sm:$0xff]
    %v745 = vld [vmem:[%s100 + $0xe0] sm:$0xff]
    %v746 = vld [vmem:[%s100 + $0xe8] sm:$0xff]
    %v747 = vld [vmem:[%s100 + $0xf0] sm:$0xff]
    %v748 = vld [vmem:[%s100 + $0xf8] sm:$0xff]
    %v749 = vsub.f32 1.0, %v173
    %v750 = vsub.f32 1.0, %v174
    %v751 = vsub.f32 1.0, %v175
    %v752 = vsub.f32 1.0, %v176
    %v753 = vsub.f32 1.0, %v177
    %v754 = vsub.f32 1.0, %v178
    %v755 = vsub.f32 1.0, %v179
    %v756 = vsub.f32 1.0, %v180
    %v757 = vsub.f32 1.0, %v181
    %v758 = vsub.f32 1.0, %v182
    %v759 = vsub.f32 1.0, %v183
    %v760 = vsub.f32 1.0, %v184
    %v761 = vsub.f32 1.0, %v185
    %v762 = vsub.f32 1.0, %v186
    %v763 = vsub.f32 1.0, %v187
    %v764 = vsub.f32 1.0, %v188
    %v765 = vsub.f32 1.0, %v189
    %v766 = vsub.f32 1.0, %v190
    %v767 = vsub.f32 1.0, %v191
    %v768 = vsub.f32 1.0, %v192
    %v769 = vsub.f32 1.0, %v193
    %v770 = vsub.f32 1.0, %v194
    %v771 = vsub.f32 1.0, %v195
    %v772 = vsub.f32 1.0, %v196
    %v773 = vsub.f32 1.0, %v197
    %v774 = vsub.f32 1.0, %v198
    %v775 = vsub.f32 1.0, %v199
    %v776 = vsub.f32 1.0, %v200
    %v777 = vsub.f32 1.0, %v201
    %v778 = vsub.f32 1.0, %v202
    %v779 = vsub.f32 1.0, %v203
    %v780 = vsub.f32 1.0, %v204
    %v781 = vmul.f32 %v749, %v141
    %v782 = vmul.f32 %v750, %v142
    %v783 = vmul.f32 %v751, %v143
    %v784 = vmul.f32 %v752, %v144
    %v785 = vmul.f32 %v753, %v145
    %v786 = vmul.f32 %v754, %v146
    %v787 = vmul.f32 %v755, %v147
    %v788 = vmul.f32 %v756, %v148
    %v789 = vmul.f32 %v757, %v149
    %v790 = vmul.f32 %v758, %v150
    %v791 = vmul.f32 %v759, %v151
    %v792 = vmul.f32 %v760, %v152
    %v793 = vmul.f32 %v761, %v153
    %v794 = vmul.f32 %v762, %v154
    %v795 = vmul.f32 %v763, %v155
    %v796 = vmul.f32 %v764, %v156
    %v797 = vmul.f32 %v765, %v157
    %v798 = vmul.f32 %v766, %v158
    %v799 = vmul.f32 %v767, %v159
    %v800 = vmul.f32 %v768, %v160
    %v801 = vmul.f32 %v769, %v161
    %v802 = vmul.f32 %v770, %v162
    %v803 = vmul.f32 %v771, %v163
    %v804 = vmul.f32 %v772, %v164
    %v805 = vmul.f32 %v773, %v165
    %v806 = vmul.f32 %v774, %v166
    %v807 = vmul.f32 %v775, %v167
    %v808 = vmul.f32 %v776, %v168
    %v809 = vmul.f32 %v777, %v169
    %v810 = vmul.f32 %v778, %v170
    %v811 = vmul.f32 %v779, %v171
    %v812 = vmul.f32 %v780, %v172
    %v813 = vsub.f32 %v717, 1.0
    %v814 = vsub.f32 %v718, 1.0
    %v815 = vsub.f32 %v719, 1.0
    %v816 = vsub.f32 %v720, 1.0
    %v817 = vsub.f32 %v721, 1.0
    %v818 = vsub.f32 %v722, 1.0
    %v819 = vsub.f32 %v723, 1.0
    %v820 = vsub.f32 %v724, 1.0
    %v821 = vsub.f32 %v725, 1.0
    %v822 = vsub.f32 %v726, 1.0
    %v823 = vsub.f32 %v727, 1.0
    %v824 = vsub.f32 %v728, 1.0
    %v825 = vsub.f32 %v729, 1.0
    %v826 = vsub.f32 %v730, 1.0
    %v827 = vsub.f32 %v731, 1.0
    %v828 = vsub.f32 %v732, 1.0
    %v829 = vsub.f32 %v733, 1.0
    %v830 = vsub.f32 %v734, 1.0
    %v831 = vsub.f32 %v735, 1.0
    %v832 = vsub.f32 %v736, 1.0
    %v833 = vsub.f32 %v737, 1.0
    %v834 = vsub.f32 %v738, 1.0
    %v835 = vsub.f32 %v739, 1.0
    %v836 = vsub.f32 %v740, 1.0
    %v837 = vsub.f32 %v741, 1.0
    %v838 = vsub.f32 %v742, 1.0
    %v839 = vsub.f32 %v743, 1.0
    %v840 = vsub.f32 %v744, 1.0
    %v841 = vsub.f32 %v745, 1.0
    %v842 = vsub.f32 %v746, 1.0
    %v843 = vsub.f32 %v747, 1.0
    %v844 = vsub.f32 %v748, 1.0
    %846 = vset.pattern.permute.xlu0 0
    %847 = vperm.xlu0 %846, %v813
    %v848 = vpop.permute.xlu0 %847
    %851 = vset.pattern.permute.xlu0 0
    %852 = vperm.xlu0 %851, %v814
    %v853 = vpop.permute.xlu0 %852
    %856 = vset.pattern.permute.xlu0 0
    %857 = vperm.xlu0 %856, %v815
    %v858 = vpop.permute.xlu0 %857
    %861 = vset.pattern.permute.xlu0 0
    %862 = vperm.xlu0 %861, %v816
    %v863 = vpop.permute.xlu0 %862
    %866 = vset.pattern.permute.xlu0 0
    %867 = vperm.xlu0 %866, %v817
    %v868 = vpop.permute.xlu0 %867
    %871 = vset.pattern.permute.xlu0 0
    %872 = vperm.xlu0 %871, %v818
    %v873 = vpop.permute.xlu0 %872
    %876 = vset.pattern.permute.xlu0 0
    %877 = vperm.xlu0 %876, %v819
    %v878 = vpop.permute.xlu0 %877
    %881 = vset.pattern.permute.xlu0 0
    %882 = vperm.xlu0 %881, %v820
    %v883 = vpop.permute.xlu0 %882
    %886 = vset.pattern.permute.xlu0 0
    %887 = vperm.xlu0 %886, %v821
    %v888 = vpop.permute.xlu0 %887
    %891 = vset.pattern.permute.xlu0 0
    %892 = vperm.xlu0 %891, %v822
    %v893 = vpop.permute.xlu0 %892
    %896 = vset.pattern.permute.xlu0 0
    %897 = vperm.xlu0 %896, %v823
    %v898 = vpop.permute.xlu0 %897
    %901 = vset.pattern.permute.xlu0 0
    %902 = vperm.xlu0 %901, %v824
    %v903 = vpop.permute.xlu0 %902
    %906 = vset.pattern.permute.xlu0 0
    %907 = vperm.xlu0 %906, %v825
    %v908 = vpop.permute.xlu0 %907
    %911 = vset.pattern.permute.xlu0 0
    %912 = vperm.xlu0 %911, %v826
    %v913 = vpop.permute.xlu0 %912
    %916 = vset.pattern.permute.xlu0 0
    %917 = vperm.xlu0 %916, %v827
    %v918 = vpop.permute.xlu0 %917
    %921 = vset.pattern.permute.xlu0 0
    %922 = vperm.xlu0 %921, %v828
    %v923 = vpop.permute.xlu0 %922
    %926 = vset.pattern.permute.xlu0 0
    %927 = vperm.xlu0 %926, %v829
    %v928 = vpop.permute.xlu0 %927
    %931 = vset.pattern.permute.xlu0 0
    %932 = vperm.xlu0 %931, %v830
    %v933 = vpop.permute.xlu0 %932
    %936 = vset.pattern.permute.xlu0 0
    %937 = vperm.xlu0 %936, %v831
    %v938 = vpop.permute.xlu0 %937
    %941 = vset.pattern.permute.xlu0 0
    %942 = vperm.xlu0 %941, %v832
    %v943 = vpop.permute.xlu0 %942
    %946 = vset.pattern.permute.xlu0 0
    %947 = vperm.xlu0 %946, %v833
    %v948 = vpop.permute.xlu0 %947
    %951 = vset.pattern.permute.xlu0 0
    %952 = vperm.xlu0 %951, %v834
    %v953 = vpop.permute.xlu0 %952
    %956 = vset.pattern.permute.xlu0 0
    %957 = vperm.xlu0 %956, %v835
    %v958 = vpop.permute.xlu0 %957
    %961 = vset.pattern.permute.xlu0 0
    %962 = vperm.xlu0 %961, %v836
    %v963 = vpop.permute.xlu0 %962
    %966 = vset.pattern.permute.xlu0 0
    %967 = vperm.xlu0 %966, %v837
    %v968 = vpop.permute.xlu0 %967
    %971 = vset.pattern.permute.xlu0 0
    %972 = vperm.xlu0 %971, %v838
    %v973 = vpop.permute.xlu0 %972
    %976 = vset.pattern.permute.xlu0 0
    %977 = vperm.xlu0 %976, %v839
    %v978 = vpop.permute.xlu0 %977
    %981 = vset.pattern.permute.xlu0 0
    %982 = vperm.xlu0 %981, %v840
    %v983 = vpop.permute.xlu0 %982
    %986 = vset.pattern.permute.xlu0 0
    %987 = vperm.xlu0 %986, %v841
    %v988 = vpop.permute.xlu0 %987
    %991 = vset.pattern.permute.xlu0 0
    %992 = vperm.xlu0 %991, %v842
    %v993 = vpop.permute.xlu0 %992
    %996 = vset.pattern.permute.xlu0 0
    %997 = vperm.xlu0 %996, %v843
    %v998 = vpop.permute.xlu0 %997
    %1001 = vset.pattern.permute.xlu0 0
    %1002 = vperm.xlu0 %1001, %v844
    %v1003 = vpop.permute.xlu0 %1002
    %v1005 = vmul.f32 %v848, %v173
    %v1006 = vmul.f32 %v853, %v174
    %v1007 = vmul.f32 %v858, %v175
    %v1008 = vmul.f32 %v863, %v176
    %v1009 = vmul.f32 %v868, %v177
    %v1010 = vmul.f32 %v873, %v178
    %v1011 = vmul.f32 %v878, %v179
    %v1012 = vmul.f32 %v883, %v180
    %v1013 = vmul.f32 %v888, %v181
    %v1014 = vmul.f32 %v893, %v182
    %v1015 = vmul.f32 %v898, %v183
    %v1016 = vmul.f32 %v903, %v184
    %v1017 = vmul.f32 %v908, %v185
    %v1018 = vmul.f32 %v913, %v186
    %v1019 = vmul.f32 %v918, %v187
    %v1020 = vmul.f32 %v923, %v188
    %v1021 = vmul.f32 %v928, %v189
    %v1022 = vmul.f32 %v933, %v190
    %v1023 = vmul.f32 %v938, %v191
    %v1024 = vmul.f32 %v943, %v192
    %v1025 = vmul.f32 %v948, %v193
    %v1026 = vmul.f32 %v953, %v194
    %v1027 = vmul.f32 %v958, %v195
    %v1028 = vmul.f32 %v963, %v196
    %v1029 = vmul.f32 %v968, %v197
    %v1030 = vmul.f32 %v973, %v198
    %v1031 = vmul.f32 %v978, %v199
    %v1032 = vmul.f32 %v983, %v200
    %v1033 = vmul.f32 %v988, %v201
    %v1034 = vmul.f32 %v993, %v202
    %v1035 = vmul.f32 %v998, %v203
    %v1036 = vmul.f32 %v1003, %v204
    %v1037 = vadd.f32 %v1005, 1.0
    %v1038 = vadd.f32 %v1006, 1.0
    %v1039 = vadd.f32 %v1007, 1.0
    %v1040 = vadd.f32 %v1008, 1.0
    %v1041 = vadd.f32 %v1009, 1.0
    %v1042 = vadd.f32 %v1010, 1.0
    %v1043 = vadd.f32 %v1011, 1.0
    %v1044 = vadd.f32 %v1012, 1.0
    %v1045 = vadd.f32 %v1013, 1.0
    %v1046 = vadd.f32 %v1014, 1.0
    %v1047 = vadd.f32 %v1015, 1.0
    %v1048 = vadd.f32 %v1016, 1.0
    %v1049 = vadd.f32 %v1017, 1.0
    %v1050 = vadd.f32 %v1018, 1.0
    %v1051 = vadd.f32 %v1019, 1.0
    %v1052 = vadd.f32 %v1020, 1.0
    %v1053 = vadd.f32 %v1021, 1.0
    %v1054 = vadd.f32 %v1022, 1.0
    %v1055 = vadd.f32 %v1023, 1.0
    %v1056 = vadd.f32 %v1024, 1.0
    %v1057 = vadd.f32 %v1025, 1.0
    %v1058 = vadd.f32 %v1026, 1.0
    %v1059 = vadd.f32 %v1027, 1.0
    %v1060 = vadd.f32 %v1028, 1.0
    %v1061 = vadd.f32 %v1029, 1.0
    %v1062 = vadd.f32 %v1030, 1.0
    %v1063 = vadd.f32 %v1031, 1.0
    %v1064 = vadd.f32 %v1032, 1.0
    %v1065 = vadd.f32 %v1033, 1.0
    %v1066 = vadd.f32 %v1034, 1.0
    %v1067 = vadd.f32 %v1035, 1.0
    %v1068 = vadd.f32 %v1036, 1.0
    %v1069 = vmul.f32 %v1037, %v685
    %v1070 = vmul.f32 %v1038, %v686
    %v1071 = vmul.f32 %v1039, %v687
    %v1072 = vmul.f32 %v1040, %v688
    %v1073 = vmul.f32 %v1041, %v689
    %v1074 = vmul.f32 %v1042, %v690
    %v1075 = vmul.f32 %v1043, %v691
    %v1076 = vmul.f32 %v1044, %v692
    %v1077 = vmul.f32 %v1045, %v693
    %v1078 = vmul.f32 %v1046, %v694
    %v1079 = vmul.f32 %v1047, %v695
    %v1080 = vmul.f32 %v1048, %v696
    %v1081 = vmul.f32 %v1049, %v697
    %v1082 = vmul.f32 %v1050, %v698
    %v1083 = vmul.f32 %v1051, %v699
    %v1084 = vmul.f32 %v1052, %v700
    %v1085 = vmul.f32 %v1053, %v701
    %v1086 = vmul.f32 %v1054, %v702
    %v1087 = vmul.f32 %v1055, %v703
    %v1088 = vmul.f32 %v1056, %v704
    %v1089 = vmul.f32 %v1057, %v705
    %v1090 = vmul.f32 %v1058, %v706
    %v1091 = vmul.f32 %v1059, %v707
    %v1092 = vmul.f32 %v1060, %v708
    %v1093 = vmul.f32 %v1061, %v709
    %v1094 = vmul.f32 %v1062, %v710
    %v1095 = vmul.f32 %v1063, %v711
    %v1096 = vmul.f32 %v1064, %v712
    %v1097 = vmul.f32 %v1065, %v713
    %v1098 = vmul.f32 %v1066, %v714
    %v1099 = vmul.f32 %v1067, %v715
    %v1100 = vmul.f32 %v1068, %v716
    %v1101 = vadd.f32 %v781, %v1069
    %v1102 = vadd.f32 %v782, %v1070
    %v1103 = vadd.f32 %v783, %v1071
    %v1104 = vadd.f32 %v784, %v1072
    %v1105 = vadd.f32 %v785, %v1073
    %v1106 = vadd.f32 %v786, %v1074
    %v1107 = vadd.f32 %v787, %v1075
    %v1108 = vadd.f32 %v788, %v1076
    %v1109 = vadd.f32 %v789, %v1077
    %v1110 = vadd.f32 %v790, %v1078
    %v1111 = vadd.f32 %v791, %v1079
    %v1112 = vadd.f32 %v792, %v1080
    %v1113 = vadd.f32 %v793, %v1081
    %v1114 = vadd.f32 %v794, %v1082
    %v1115 = vadd.f32 %v795, %v1083
    %v1116 = vadd.f32 %v796, %v1084
    %v1117 = vadd.f32 %v797, %v1085
    %v1118 = vadd.f32 %v798, %v1086
    %v1119 = vadd.f32 %v799, %v1087
    %v1120 = vadd.f32 %v800, %v1088
    %v1121 = vadd.f32 %v801, %v1089
    %v1122 = vadd.f32 %v802, %v1090
    %v1123 = vadd.f32 %v803, %v1091
    %v1124 = vadd.f32 %v804, %v1092
    %v1125 = vadd.f32 %v805, %v1093
    %v1126 = vadd.f32 %v806, %v1094
    %v1127 = vadd.f32 %v807, %v1095
    %v1128 = vadd.f32 %v808, %v1096
    %v1129 = vadd.f32 %v809, %v1097
    %v1130 = vadd.f32 %v810, %v1098
    %v1131 = vadd.f32 %v811, %v1099
    %v1132 = vadd.f32 %v812, %v1100
    %s1133 = sadd.s32 0, 0
    %s1134 = smul.u32 %s1133, 256
    %s1135 = ssub.s32 16, %s1134
    %p1136 = scmp.ge.s32.totalorder %s1135, 256
    // Predicated region
    $region22: #{tpu_custom_call.1} parent=1 // pred_check
      %p1137 = pneg %p1136
    $region23: #{tpu_custom_call.1} parent=1 // pred_check_branch
      %1139 = sbr.rel (%p1137) target = $region25
    $region24: #{tpu_custom_call.1} parent=1 // pred_region
      %v1140 = vld [vmem:[#allocation5] sm:$0xff]
      %v1141 = vld [vmem:[#allocation5 + $0x8] sm:$0xff]
      %v1142 = vld [vmem:[#allocation5 + $0x10] sm:$0xff]
      %v1143 = vld [vmem:[#allocation5 + $0x18] sm:$0xff]
      %v1144 = vld [vmem:[#allocation5 + $0x20] sm:$0xff]
      %v1145 = vld [vmem:[#allocation5 + $0x28] sm:$0xff]
      %v1146 = vld [vmem:[#allocation5 + $0x30] sm:$0xff]
      %v1147 = vld [vmem:[#allocation5 + $0x38] sm:$0xff]
      %v1148 = vld [vmem:[#allocation5 + $0x40] sm:$0xff]
      %v1149 = vld [vmem:[#allocation5 + $0x48] sm:$0xff]
      %v1150 = vld [vmem:[#allocation5 + $0x50] sm:$0xff]
      %v1151 = vld [vmem:[#allocation5 + $0x58] sm:$0xff]
      %v1152 = vld [vmem:[#allocation5 + $0x60] sm:$0xff]
      %v1153 = vld [vmem:[#allocation5 + $0x68] sm:$0xff]
      %v1154 = vld [vmem:[#allocation5 + $0x70] sm:$0xff]
      %v1155 = vld [vmem:[#allocation5 + $0x78] sm:$0xff]
      %v1156 = vld [vmem:[#allocation5 + $0x80] sm:$0xff]
      %v1157 = vld [vmem:[#allocation5 + $0x88] sm:$0xff]
      %v1158 = vld [vmem:[#allocation5 + $0x90] sm:$0xff]
      %v1159 = vld [vmem:[#allocation5 + $0x98] sm:$0xff]
      %v1160 = vld [vmem:[#allocation5 + $0xa0] sm:$0xff]
      %v1161 = vld [vmem:[#allocation5 + $0xa8] sm:$0xff]
      %v1162 = vld [vmem:[#allocation5 + $0xb0] sm:$0xff]
      %v1163 = vld [vmem:[#allocation5 + $0xb8] sm:$0xff]
      %v1164 = vld [vmem:[#allocation5 + $0xc0] sm:$0xff]
      %v1165 = vld [vmem:[#allocation5 + $0xc8] sm:$0xff]
      %v1166 = vld [vmem:[#allocation5 + $0xd0] sm:$0xff]
      %v1167 = vld [vmem:[#allocation5 + $0xd8] sm:$0xff]
      %v1168 = vld [vmem:[#allocation5 + $0xe0] sm:$0xff]
      %v1169 = vld [vmem:[#allocation5 + $0xe8] sm:$0xff]
      %v1170 = vld [vmem:[#allocation5 + $0xf0] sm:$0xff]
      %v1171 = vld [vmem:[#allocation5 + $0xf8] sm:$0xff]
      %v1172 = vadd.f32 %v1101, 0.0
      %v1173 = vadd.f32 %v1102, 0.0
      %v1174 = vadd.f32 %v1103, 0.0
      %v1175 = vadd.f32 %v1104, 0.0
      %v1176 = vadd.f32 %v1105, 0.0
      %v1177 = vadd.f32 %v1106, 0.0
      %v1178 = vadd.f32 %v1107, 0.0
      %v1179 = vadd.f32 %v1108, 0.0
      %v1180 = vadd.f32 %v1109, 0.0
      %v1181 = vadd.f32 %v1110, 0.0
      %v1182 = vadd.f32 %v1111, 0.0
      %v1183 = vadd.f32 %v1112, 0.0
      %v1184 = vadd.f32 %v1113, 0.0
      %v1185 = vadd.f32 %v1114, 0.0
      %v1186 = vadd.f32 %v1115, 0.0
      %v1187 = vadd.f32 %v1116, 0.0
      %v1188 = vadd.f32 %v1117, 0.0
      %v1189 = vadd.f32 %v1118, 0.0
      %v1190 = vadd.f32 %v1119, 0.0
      %v1191 = vadd.f32 %v1120, 0.0
      %v1192 = vadd.f32 %v1121, 0.0
      %v1193 = vadd.f32 %v1122, 0.0
      %v1194 = vadd.f32 %v1123, 0.0
      %v1195 = vadd.f32 %v1124, 0.0
      %v1196 = vadd.f32 %v1125, 0.0
      %v1197 = vadd.f32 %v1126, 0.0
      %v1198 = vadd.f32 %v1127, 0.0
      %v1199 = vadd.f32 %v1128, 0.0
      %v1200 = vadd.f32 %v1129, 0.0
      %v1201 = vadd.f32 %v1130, 0.0
      %v1202 = vadd.f32 %v1131, 0.0
      %v1203 = vadd.f32 %v1132, 0.0
      %v1204 = vadd.f32 %v1140, %v1172
      %v1205 = vadd.f32 %v1141, %v1173
      %v1206 = vadd.f32 %v1142, %v1174
      %v1207 = vadd.f32 %v1143, %v1175
      %v1208 = vadd.f32 %v1144, %v1176
      %v1209 = vadd.f32 %v1145, %v1177
      %v1210 = vadd.f32 %v1146, %v1178
      %v1211 = vadd.f32 %v1147, %v1179
      %v1212 = vadd.f32 %v1148, %v1180
      %v1213 = vadd.f32 %v1149, %v1181
      %v1214 = vadd.f32 %v1150, %v1182
      %v1215 = vadd.f32 %v1151, %v1183
      %v1216 = vadd.f32 %v1152, %v1184
      %v1217 = vadd.f32 %v1153, %v1185
      %v1218 = vadd.f32 %v1154, %v1186
      %v1219 = vadd.f32 %v1155, %v1187
      %v1220 = vadd.f32 %v1156, %v1188
      %v1221 = vadd.f32 %v1157, %v1189
      %v1222 = vadd.f32 %v1158, %v1190
      %v1223 = vadd.f32 %v1159, %v1191
      %v1224 = vadd.f32 %v1160, %v1192
      %v1225 = vadd.f32 %v1161, %v1193
      %v1226 = vadd.f32 %v1162, %v1194
      %v1227 = vadd.f32 %v1163, %v1195
      %v1228 = vadd.f32 %v1164, %v1196
      %v1229 = vadd.f32 %v1165, %v1197
      %v1230 = vadd.f32 %v1166, %v1198
      %v1231 = vadd.f32 %v1167, %v1199
      %v1232 = vadd.f32 %v1168, %v1200
      %v1233 = vadd.f32 %v1169, %v1201
      %v1234 = vadd.f32 %v1170, %v1202
      %v1235 = vadd.f32 %v1171, %v1203
      %1236 = vst [vmem:[#allocation5] sm:$0xff] %v1204
      %1237 = vst [vmem:[#allocation5 + $0x8] sm:$0xff] %v1205
      %1238 = vst [vmem:[#allocation5 + $0x10] sm:$0xff] %v1206
      %1239 = vst [vmem:[#allocation5 + $0x18] sm:$0xff] %v1207
      %1240 = vst [vmem:[#allocation5 + $0x20] sm:$0xff] %v1208
      %1241 = vst [vmem:[#allocation5 + $0x28] sm:$0xff] %v1209
      %1242 = vst [vmem:[#allocation5 + $0x30] sm:$0xff] %v1210
      %1243 = vst [vmem:[#allocation5 + $0x38] sm:$0xff] %v1211
      %1244 = vst [vmem:[#allocation5 + $0x40] sm:$0xff] %v1212
      %1245 = vst [vmem:[#allocation5 + $0x48] sm:$0xff] %v1213
      %1246 = vst [vmem:[#allocation5 + $0x50] sm:$0xff] %v1214
      %1247 = vst [vmem:[#allocation5 + $0x58] sm:$0xff] %v1215
      %1248 = vst [vmem:[#allocation5 + $0x60] sm:$0xff] %v1216
      %1249 = vst [vmem:[#allocation5 + $0x68] sm:$0xff] %v1217
      %1250 = vst [vmem:[#allocation5 + $0x70] sm:$0xff] %v1218
      %1251 = vst [vmem:[#allocation5 + $0x78] sm:$0xff] %v1219
      %1252 = vst [vmem:[#allocation5 + $0x80] sm:$0xff] %v1220
      %1253 = vst [vmem:[#allocation5 + $0x88] sm:$0xff] %v1221
      %1254 = vst [vmem:[#allocation5 + $0x90] sm:$0xff] %v1222
      %1255 = vst [vmem:[#allocation5 + $0x98] sm:$0xff] %v1223
      %1256 = vst [vmem:[#allocation5 + $0xa0] sm:$0xff] %v1224
      %1257 = vst [vmem:[#allocation5 + $0xa8] sm:$0xff] %v1225
      %1258 = vst [vmem:[#allocation5 + $0xb0] sm:$0xff] %v1226
      %1259 = vst [vmem:[#allocation5 + $0xb8] sm:$0xff] %v1227
      %1260 = vst [vmem:[#allocation5 + $0xc0] sm:$0xff] %v1228
      %1261 = vst [vmem:[#allocation5 + $0xc8] sm:$0xff] %v1229
      %1262 = vst [vmem:[#allocation5 + $0xd0] sm:$0xff] %v1230
      %1263 = vst [vmem:[#allocation5 + $0xd8] sm:$0xff] %v1231
      %1264 = vst [vmem:[#allocation5 + $0xe0] sm:$0xff] %v1232
      %1265 = vst [vmem:[#allocation5 + $0xe8] sm:$0xff] %v1233
      %1266 = vst [vmem:[#allocation5 + $0xf0] sm:$0xff] %v1234
      %1267 = vst [vmem:[#allocation5 + $0xf8] sm:$0xff] %v1235
    $region25: #{tpu_custom_call.1} parent=1 // pred_fallthru
      _
    %p1268 = scmp.lt.s32.totalorder %s1135, 256
    // Predicated region
    $region26: #{tpu_custom_call.1} parent=1 // pred_check
      %p1269 = pneg %p1268
    $region27: #{tpu_custom_call.1} parent=1 // pred_check_branch
      %1271 = sbr.rel (%p1269) target = $region29
    $region28: #{tpu_custom_call.1} parent=1 // pred_region
      %v1272 = vlaneseq
      %v1273 = vshrl.u32 %v1272, 7
      %v1274 = vadd.s32 %v1273, 8
      %v1275 = vadd.s32 %v1273, 16
      %v1276 = vadd.s32 %v1273, 24
      %v1277 = vadd.s32 %v1273, 32
      %v1278 = vadd.s32 %v1273, 40
      %v1279 = vadd.s32 %v1273, 48
      %v1280 = vadd.s32 %v1273, 56
      %v1281 = vadd.s32 %v1273, 64
      %v1282 = vadd.s32 %v1273, 72
      %v1283 = vadd.s32 %v1273, 80
      %v1284 = vadd.s32 %v1273, 88
      %v1285 = vadd.s32 %v1273, 96
      %v1286 = vadd.s32 %v1273, 104
      %v1287 = vadd.s32 %v1273, 112
      %v1288 = vadd.s32 %v1273, 120
      %v1289 = vadd.s32 %v1273, 128
      %v1290 = vadd.s32 %v1273, 136
      %v1291 = vadd.s32 %v1273, 144
      %v1292 = vadd.s32 %v1273, 152
      %v1293 = vadd.s32 %v1273, 160
      %v1294 = vadd.s32 %v1273, 168
      %v1295 = vadd.s32 %v1273, 176
      %v1296 = vadd.s32 %v1273, 184
      %v1297 = vadd.s32 %v1273, 192
      %v1298 = vadd.s32 %v1273, 200
      %v1299 = vadd.s32 %v1273, 208
      %v1300 = vadd.s32 %v1273, 216
      %v1301 = vadd.s32 %v1273, 224
      %v1302 = vadd.s32 %v1273, 232
      %v1303 = vadd.s32 %v1273, 240
      %v1304 = vadd.s32 %v1273, 248
      %v1305 = vstv %s1135
      %vm1306 = vcmp.lt.s32.totalorder %v1273, %v1305
      %vm1307 = vcmp.lt.s32.totalorder %v1274, %v1305
      %vm1308 = vcmp.lt.s32.totalorder %v1275, %v1305
      %vm1309 = vcmp.lt.s32.totalorder %v1276, %v1305
      %vm1310 = vcmp.lt.s32.totalorder %v1277, %v1305
      %vm1311 = vcmp.lt.s32.totalorder %v1278, %v1305
      %vm1312 = vcmp.lt.s32.totalorder %v1279, %v1305
      %vm1313 = vcmp.lt.s32.totalorder %v1280, %v1305
      %vm1314 = vcmp.lt.s32.totalorder %v1281, %v1305
      %vm1315 = vcmp.lt.s32.totalorder %v1282, %v1305
      %vm1316 = vcmp.lt.s32.totalorder %v1283, %v1305
      %vm1317 = vcmp.lt.s32.totalorder %v1284, %v1305
      %vm1318 = vcmp.lt.s32.totalorder %v1285, %v1305
      %vm1319 = vcmp.lt.s32.totalorder %v1286, %v1305
      %vm1320 = vcmp.lt.s32.totalorder %v1287, %v1305
      %vm1321 = vcmp.lt.s32.totalorder %v1288, %v1305
      %vm1322 = vcmp.lt.s32.totalorder %v1289, %v1305
      %vm1323 = vcmp.lt.s32.totalorder %v1290, %v1305
      %vm1324 = vcmp.lt.s32.totalorder %v1291, %v1305
      %vm1325 = vcmp.lt.s32.totalorder %v1292, %v1305
      %vm1326 = vcmp.lt.s32.totalorder %v1293, %v1305
      %vm1327 = vcmp.lt.s32.totalorder %v1294, %v1305
      %vm1328 = vcmp.lt.s32.totalorder %v1295, %v1305
      %vm1329 = vcmp.lt.s32.totalorder %v1296, %v1305
      %vm1330 = vcmp.lt.s32.totalorder %v1297, %v1305
      %vm1331 = vcmp.lt.s32.totalorder %v1298, %v1305
      %vm1332 = vcmp.lt.s32.totalorder %v1299, %v1305
      %vm1333 = vcmp.lt.s32.totalorder %v1300, %v1305
      %vm1334 = vcmp.lt.s32.totalorder %v1301, %v1305
      %vm1335 = vcmp.lt.s32.totalorder %v1302, %v1305
      %vm1336 = vcmp.lt.s32.totalorder %v1303, %v1305
      %vm1337 = vcmp.lt.s32.totalorder %v1304, %v1305
      %v1338 = vsel %vm1306, %v1101, 0.0
      %v1339 = vsel %vm1307, %v1102, 0.0
      %v1340 = vsel %vm1308, %v1103, 0.0
      %v1341 = vsel %vm1309, %v1104, 0.0
      %v1342 = vsel %vm1310, %v1105, 0.0
      %v1343 = vsel %vm1311, %v1106, 0.0
      %v1344 = vsel %vm1312, %v1107, 0.0
      %v1345 = vsel %vm1313, %v1108, 0.0
      %v1346 = vsel %vm1314, %v1109, 0.0
      %v1347 = vsel %vm1315, %v1110, 0.0
      %v1348 = vsel %vm1316, %v1111, 0.0
      %v1349 = vsel %vm1317, %v1112, 0.0
      %v1350 = vsel %vm1318, %v1113, 0.0
      %v1351 = vsel %vm1319, %v1114, 0.0
      %v1352 = vsel %vm1320, %v1115, 0.0
      %v1353 = vsel %vm1321, %v1116, 0.0
      %v1354 = vsel %vm1322, %v1117, 0.0
      %v1355 = vsel %vm1323, %v1118, 0.0
      %v1356 = vsel %vm1324, %v1119, 0.0
      %v1357 = vsel %vm1325, %v1120, 0.0
      %v1358 = vsel %vm1326, %v1121, 0.0
      %v1359 = vsel %vm1327, %v1122, 0.0
      %v1360 = vsel %vm1328, %v1123, 0.0
      %v1361 = vsel %vm1329, %v1124, 0.0
      %v1362 = vsel %vm1330, %v1125, 0.0
      %v1363 = vsel %vm1331, %v1126, 0.0
      %v1364 = vsel %vm1332, %v1127, 0.0
      %v1365 = vsel %vm1333, %v1128, 0.0
      %v1366 = vsel %vm1334, %v1129, 0.0
      %v1367 = vsel %vm1335, %v1130, 0.0
      %v1368 = vsel %vm1336, %v1131, 0.0
      %v1369 = vsel %vm1337, %v1132, 0.0
      %v1370 = vld [vmem:[#allocation5] sm:$0xff]
      %v1371 = vld [vmem:[#allocation5 + $0x8] sm:$0xff]
      %v1372 = vld [vmem:[#allocation5 + $0x10] sm:$0xff]
      %v1373 = vld [vmem:[#allocation5 + $0x18] sm:$0xff]
      %v1374 = vld [vmem:[#allocation5 + $0x20] sm:$0xff]
      %v1375 = vld [vmem:[#allocation5 + $0x28] sm:$0xff]
      %v1376 = vld [vmem:[#allocation5 + $0x30] sm:$0xff]
      %v1377 = vld [vmem:[#allocation5 + $0x38] sm:$0xff]
      %v1378 = vld [vmem:[#allocation5 + $0x40] sm:$0xff]
      %v1379 = vld [vmem:[#allocation5 + $0x48] sm:$0xff]
      %v1380 = vld [vmem:[#allocation5 + $0x50] sm:$0xff]
      %v1381 = vld [vmem:[#allocation5 + $0x58] sm:$0xff]
      %v1382 = vld [vmem:[#allocation5 + $0x60] sm:$0xff]
      %v1383 = vld [vmem:[#allocation5 + $0x68] sm:$0xff]
      %v1384 = vld [vmem:[#allocation5 + $0x70] sm:$0xff]
      %v1385 = vld [vmem:[#allocation5 + $0x78] sm:$0xff]
      %v1386 = vld [vmem:[#allocation5 + $0x80] sm:$0xff]
      %v1387 = vld [vmem:[#allocation5 + $0x88] sm:$0xff]
      %v1388 = vld [vmem:[#allocation5 + $0x90] sm:$0xff]
      %v1389 = vld [vmem:[#allocation5 + $0x98] sm:$0xff]
      %v1390 = vld [vmem:[#allocation5 + $0xa0] sm:$0xff]
      %v1391 = vld [vmem:[#allocation5 + $0xa8] sm:$0xff]
      %v1392 = vld [vmem:[#allocation5 + $0xb0] sm:$0xff]
      %v1393 = vld [vmem:[#allocation5 + $0xb8] sm:$0xff]
      %v1394 = vld [vmem:[#allocation5 + $0xc0] sm:$0xff]
      %v1395 = vld [vmem:[#allocation5 + $0xc8] sm:$0xff]
      %v1396 = vld [vmem:[#allocation5 + $0xd0] sm:$0xff]
      %v1397 = vld [vmem:[#allocation5 + $0xd8] sm:$0xff]
      %v1398 = vld [vmem:[#allocation5 + $0xe0] sm:$0xff]
      %v1399 = vld [vmem:[#allocation5 + $0xe8] sm:$0xff]
      %v1400 = vld [vmem:[#allocation5 + $0xf0] sm:$0xff]
      %v1401 = vld [vmem:[#allocation5 + $0xf8] sm:$0xff]
      %v1402 = vadd.f32 %v1338, 0.0
      %v1403 = vadd.f32 %v1339, 0.0
      %v1404 = vadd.f32 %v1340, 0.0
      %v1405 = vadd.f32 %v1341, 0.0
      %v1406 = vadd.f32 %v1342, 0.0
      %v1407 = vadd.f32 %v1343, 0.0
      %v1408 = vadd.f32 %v1344, 0.0
      %v1409 = vadd.f32 %v1345, 0.0
      %v1410 = vadd.f32 %v1346, 0.0
      %v1411 = vadd.f32 %v1347, 0.0
      %v1412 = vadd.f32 %v1348, 0.0
      %v1413 = vadd.f32 %v1349, 0.0
      %v1414 = vadd.f32 %v1350, 0.0
      %v1415 = vadd.f32 %v1351, 0.0
      %v1416 = vadd.f32 %v1352, 0.0
      %v1417 = vadd.f32 %v1353, 0.0
      %v1418 = vadd.f32 %v1354, 0.0
      %v1419 = vadd.f32 %v1355, 0.0
      %v1420 = vadd.f32 %v1356, 0.0
      %v1421 = vadd.f32 %v1357, 0.0
      %v1422 = vadd.f32 %v1358, 0.0
      %v1423 = vadd.f32 %v1359, 0.0
      %v1424 = vadd.f32 %v1360, 0.0
      %v1425 = vadd.f32 %v1361, 0.0
      %v1426 = vadd.f32 %v1362, 0.0
      %v1427 = vadd.f32 %v1363, 0.0
      %v1428 = vadd.f32 %v1364, 0.0
      %v1429 = vadd.f32 %v1365, 0.0
      %v1430 = vadd.f32 %v1366, 0.0
      %v1431 = vadd.f32 %v1367, 0.0
      %v1432 = vadd.f32 %v1368, 0.0
      %v1433 = vadd.f32 %v1369, 0.0
      %v1434 = vadd.f32 %v1370, %v1402
      %v1435 = vadd.f32 %v1371, %v1403
      %v1436 = vadd.f32 %v1372, %v1404
      %v1437 = vadd.f32 %v1373, %v1405
      %v1438 = vadd.f32 %v1374, %v1406
      %v1439 = vadd.f32 %v1375, %v1407
      %v1440 = vadd.f32 %v1376, %v1408
      %v1441 = vadd.f32 %v1377, %v1409
      %v1442 = vadd.f32 %v1378, %v1410
      %v1443 = vadd.f32 %v1379, %v1411
      %v1444 = vadd.f32 %v1380, %v1412
      %v1445 = vadd.f32 %v1381, %v1413
      %v1446 = vadd.f32 %v1382, %v1414
      %v1447 = vadd.f32 %v1383, %v1415
      %v1448 = vadd.f32 %v1384, %v1416
      %v1449 = vadd.f32 %v1385, %v1417
      %v1450 = vadd.f32 %v1386, %v1418
      %v1451 = vadd.f32 %v1387, %v1419
      %v1452 = vadd.f32 %v1388, %v1420
      %v1453 = vadd.f32 %v1389, %v1421
      %v1454 = vadd.f32 %v1390, %v1422
      %v1455 = vadd.f32 %v1391, %v1423
      %v1456 = vadd.f32 %v1392, %v1424
      %v1457 = vadd.f32 %v1393, %v1425
      %v1458 = vadd.f32 %v1394, %v1426
      %v1459 = vadd.f32 %v1395, %v1427
      %v1460 = vadd.f32 %v1396, %v1428
      %v1461 = vadd.f32 %v1397, %v1429
      %v1462 = vadd.f32 %v1398, %v1430
      %v1463 = vadd.f32 %v1399, %v1431
      %v1464 = vadd.f32 %v1400, %v1432
      %v1465 = vadd.f32 %v1401, %v1433
      %1466 = vst [vmem:[#allocation5] sm:$0xff] %v1434
      %1467 = vst [vmem:[#allocation5 + $0x8] sm:$0xff] %v1435
      %1468 = vst [vmem:[#allocation5 + $0x10] sm:$0xff] %v1436
      %1469 = vst [vmem:[#allocation5 + $0x18] sm:$0xff] %v1437
      %1470 = vst [vmem:[#allocation5 + $0x20] sm:$0xff] %v1438
      %1471 = vst [vmem:[#allocation5 + $0x28] sm:$0xff] %v1439
      %1472 = vst [vmem:[#allocation5 + $0x30] sm:$0xff] %v1440
      %1473 = vst [vmem:[#allocation5 + $0x38] sm:$0xff] %v1441
      %1474 = vst [vmem:[#allocation5 + $0x40] sm:$0xff] %v1442
      %1475 = vst [vmem:[#allocation5 + $0x48] sm:$0xff] %v1443
      %1476 = vst [vmem:[#allocation5 + $0x50] sm:$0xff] %v1444
      %1477 = vst [vmem:[#allocation5 + $0x58] sm:$0xff] %v1445
      %1478 = vst [vmem:[#allocation5 + $0x60] sm:$0xff] %v1446
      %1479 = vst [vmem:[#allocation5 + $0x68] sm:$0xff] %v1447
      %1480 = vst [vmem:[#allocation5 + $0x70] sm:$0xff] %v1448
      %1481 = vst [vmem:[#allocation5 + $0x78] sm:$0xff] %v1449
      %1482 = vst [vmem:[#allocation5 + $0x80] sm:$0xff] %v1450
      %1483 = vst [vmem:[#allocation5 + $0x88] sm:$0xff] %v1451
      %1484 = vst [vmem:[#allocation5 + $0x90] sm:$0xff] %v1452
      %1485 = vst [vmem:[#allocation5 + $0x98] sm:$0xff] %v1453
      %1486 = vst [vmem:[#allocation5 + $0xa0] sm:$0xff] %v1454
      %1487 = vst [vmem:[#allocation5 + $0xa8] sm:$0xff] %v1455
      %1488 = vst [vmem:[#allocation5 + $0xb0] sm:$0xff] %v1456
      %1489 = vst [vmem:[#allocation5 + $0xb8] sm:$0xff] %v1457
      %1490 = vst [vmem:[#allocation5 + $0xc0] sm:$0xff] %v1458
      %1491 = vst [vmem:[#allocation5 + $0xc8] sm:$0xff] %v1459
      %1492 = vst [vmem:[#allocation5 + $0xd0] sm:$0xff] %v1460
      %1493 = vst [vmem:[#allocation5 + $0xd8] sm:$0xff] %v1461
      %1494 = vst [vmem:[#allocation5 + $0xe0] sm:$0xff] %v1462
      %1495 = vst [vmem:[#allocation5 + $0xe8] sm:$0xff] %v1463
      %1496 = vst [vmem:[#allocation5 + $0xf0] sm:$0xff] %v1464
      %1497 = vst [vmem:[#allocation5 + $0xf8] sm:$0xff] %v1465
    $region29: #{tpu_custom_call.1} parent=1 // pred_fallthru
      _
    // Predicated region
    $region30: #{tpu_custom_call.1} parent=1 // pred_check
      _
    $region31: #{tpu_custom_call.1} parent=1 // pred_check_branch
      %1499 = sbr.rel (0) target = $region33
    $region32: #{tpu_custom_call.1} parent=1 // pred_region
      %s1501 = ssub.s32 4096, 4096
      %1502 = vsyncadd [#allocation4], %s1501
      %s1503 = sshll.u32 [#allocation5], 4
      %s1504 = int_to_ptr.vmem [resolvable:$true] %s1503
      %1509 = dma.vmem_to_hbm [thread:$0]  %s1504, 4096, %s3, [#allocation4], 128, 128, 8
    $region33: #{tpu_custom_call.1} parent=1 // pred_fallthru
      _
    // Predicated region
    $region34: #{tpu_custom_call.1} parent=1 // pred_check
      _
    $region35: #{tpu_custom_call.1} parent=1 // pred_check_branch
      %1511 = sbr.rel (0) target = $region37
    $region36: #{tpu_custom_call.1} parent=1 // pred_region
      %1512 = dma.done [#allocation4], 4096
    $region37: #{tpu_custom_call.1} parent=1 // pred_fallthru
      _
    %1513 = vsyncpa [#allocation3], 1
    %1514 = vsyncpa [#allocation4], 1

</llo_original>
